<compile_context>
chip_gen: v7x
topology: tpu7x:2x2x1
jax: 0.10.0
libtpu: 0.0.40
codegen_flags: <defaults>
</compile_context>

<pallas_src>
import functools

import jax
import jax.numpy as jnp
import numpy as np
from jax.experimental import pallas as pl
from jax.experimental.pallas import tpu as pltpu

_VMEM_LIMIT = 48 * 1024 * 1024  # safe on v5e/v6e (128 MiB) and v7x (64 MiB)


def _round_up(x, m):
    return ((x + m - 1) // m) * m


def _pick_row_tile(hw, target=512):
    """Largest tile <= target that divides hw and is a multiple of 8 (else hw)."""
    if hw <= target:
        return hw
    t = (target // 8) * 8
    while t >= 8:
        if hw % t == 0:
            return t
        t -= 8
    return hw


# ----------------------------------------------------------------------------
# Kernel 1: fused direct 3x3 conv (padding=1) + folded-BN affine (+ ReLU)
#           + optional per-output-row channel sums (for the SE average pool).
# Grid = (B, Ho); one output image row per step; the 9 taps are accumulated
# in-register in f32 and the epilogue is applied before a single store.
# ----------------------------------------------------------------------------
def _conv3x3_bn_kernel(*refs, n_x, col_strided, wo, apply_relu, emit_rowsum):
    x_refs = refs[:n_x]
    w_ref = refs[n_x]
    scale_ref = refs[n_x + 1]
    bias_ref = refs[n_x + 2]
    o_ref = refs[n_x + 3]

    cout = o_ref.shape[-1]
    acc = jnp.zeros((wo, cout), jnp.float32)
    for kh in range(3):
        for kw in range(3):
            if col_strided:
                # columns were pre-strided in XLA: operand kh*3+kw is already (Wo, Cin)
                a = x_refs[3 * kh + kw][0, 0]
            else:
                # stride == 1: contiguous slice of the (Wp, Cin) padded row
                a = x_refs[kh][0, 0, kw:kw + wo, :]
            acc = acc + jnp.dot(a, w_ref[3 * kh + kw],
                                preferred_element_type=jnp.float32)
    out = acc * scale_ref[...] + bias_ref[...]
    if apply_relu:
        out = jnp.maximum(out, 0.0)
    o_ref[0, 0] = out.astype(o_ref.dtype)
    if emit_rowsum:
        refs[n_x + 4][0, 0] = jnp.sum(out, axis=0, keepdims=True)


def conv3x3_bn(x_nhwc, w9, scale, bias, *, stride, relu, emit_rowsum=False):
    """Fused 3x3 conv (padding=1, given stride) + folded BN affine (+ReLU).

    x_nhwc: (B, H, W, Cin); w9: (9, Cin, Cout) taps ordered (kh, kw);
    scale/bias: (Cout,).  Returns bf16 (B, Ho, Wo, Cout) and, if emit_rowsum,
    also f32 per-output-row channel sums (B, Ho, 1, Cout).
    """
    B, H, W, Cin = x_nhwc.shape
    Cout = w9.shape[-1]
    Ho = (H - 1) // stride + 1
    Wo = (W - 1) // stride + 1
    Hp, Wp = H + 2, W + 2

    xp = jnp.pad(x_nhwc.astype(jnp.bfloat16), ((0, 0), (1, 1), (1, 1), (0, 0)))
    w9 = w9.astype(jnp.bfloat16)
    s2 = scale.reshape(1, Cout).astype(jnp.float32)
    b2 = bias.reshape(1, Cout).astype(jnp.float32)

    def row_map(kh):
        # block size along the padded-row axis is 1, so the returned block
        # index is the element offset: input row = ho*stride + kh.
        return lambda b, ho: (b, ho * stride + kh, 0, 0)

    if stride == 1:
        x_args = (xp, xp, xp)
        x_specs = [pl.BlockSpec((1, 1, Wp, Cin), row_map(kh)) for kh in range(3)]
        col_strided = False
    else:
        # Pre-extract the 3 column phases in XLA (cheap; only the strided conv1
        # uses this path) so the kernel never needs strided reads.
        views = [xp[:, :, kw: kw + stride * (Wo - 1) + 1: stride, :]
                 for kw in range(3)]
        x_args = tuple(views[kw] for kh in range(3) for kw in range(3))
        x_specs = [pl.BlockSpec((1, 1, Wo, Cin), row_map(kh))
                   for kh in range(3) for kw in range(3)]
        col_strided = True
    n_x = len(x_args)

    in_specs = x_specs + [
        pl.BlockSpec((9, Cin, Cout), lambda b, ho: (0, 0, 0)),
        pl.BlockSpec((1, Cout), lambda b, ho: (0, 0)),
        pl.BlockSpec((1, Cout), lambda b, ho: (0, 0)),
    ]
    out_shapes = [jax.ShapeDtypeStruct((B, Ho, Wo, Cout), jnp.bfloat16)]
    out_specs_list = [pl.BlockSpec((1, 1, Wo, Cout), lambda b, ho: (b, ho, 0, 0))]
    if emit_rowsum:
        out_shapes.append(jax.ShapeDtypeStruct((B, Ho, 1, Cout), jnp.float32))
        out_specs_list.append(
            pl.BlockSpec((1, 1, 1, Cout), lambda b, ho: (b, ho, 0, 0)))

    flops = 2 * B * Ho * Wo * 9 * Cin * Cout
    bytes_accessed = int(3 * B * Hp * Wp * Cin * 2 + 9 * Cin * Cout * 2
                         + B * Ho * Wo * Cout * 2)

    kern = functools.partial(_conv3x3_bn_kernel, n_x=n_x, col_strided=col_strided,
                             wo=Wo, apply_relu=relu, emit_rowsum=emit_rowsum)
    return pl.pallas_call(
        kern,
        out_shape=tuple(out_shapes) if emit_rowsum else out_shapes[0],
        grid_spec=pltpu.PrefetchScalarGridSpec(
            num_scalar_prefetch=0,
            grid=(B, Ho),
            in_specs=in_specs,
            out_specs=out_specs_list if emit_rowsum else out_specs_list[0],
        ),
        compiler_params=pltpu.CompilerParams(
            dimension_semantics=("parallel", "parallel"),
            vmem_limit_bytes=_VMEM_LIMIT),
        cost_estimate=pl.CostEstimate(flops=int(flops), transcendentals=0,
                                      bytes_accessed=bytes_accessed),
    )(*x_args, w9, s2, b2)


# ----------------------------------------------------------------------------
# Kernel 2: SE gate FCs, batched once: sigmoid(relu(pooled @ W1) @ W2)
# ----------------------------------------------------------------------------
def _se_fc_kernel(p_ref, w1_ref, w2_ref, y_ref):
    h = jnp.dot(p_ref[...], w1_ref[...], preferred_element_type=jnp.float32)
    h = jnp.maximum(h, 0.0)
    z = jnp.dot(h, w2_ref[...], preferred_element_type=jnp.float32)
    y_ref[...] = jax.nn.sigmoid(z).astype(y_ref.dtype)


def se_fc(pooled, w1_t, w2_t):
    B, C = pooled.shape
    Hd = w1_t.shape[1]
    return pl.pallas_call(
        _se_fc_kernel,
        out_shape=jax.ShapeDtypeStruct((B, C), jnp.float32),
        grid_spec=pltpu.PrefetchScalarGridSpec(
            num_scalar_prefetch=0,
            grid=(1,),
            in_specs=[pl.BlockSpec((B, C), lambda i: (0, 0)),
                      pl.BlockSpec((C, Hd), lambda i: (0, 0)),
                      pl.BlockSpec((Hd, C), lambda i: (0, 0))],
            out_specs=pl.BlockSpec((B, C), lambda i: (0, 0)),
        ),
        compiler_params=pltpu.CompilerParams(
            dimension_semantics=("arbitrary",),
            vmem_limit_bytes=_VMEM_LIMIT),
        cost_estimate=pl.CostEstimate(flops=int(4 * B * C * Hd),
                                      transcendentals=int(B * C),
                                      bytes_accessed=int(4 * (2 * B * C + 2 * C * Hd))),
    )(pooled.astype(jnp.float32), w1_t.astype(jnp.float32), w2_t.astype(jnp.float32))


# ----------------------------------------------------------------------------
# Kernel 3: SE rescale + shortcut (fused 1x1 conv + BN, or identity)
#           + residual add + final ReLU, tiled over (batch, row-tiles).
# ----------------------------------------------------------------------------
def _se_residual_proj_kernel(o2_ref, y_ref, xs_ref, ws_ref, ss_ref, sb_ref, o_ref):
    o2 = o2_ref[0].astype(jnp.float32)                               # (t, Cout)
    sc = jnp.dot(xs_ref[0], ws_ref[...], preferred_element_type=jnp.float32)
    sc = sc * ss_ref[...] + sb_ref[...]
    o_ref[0] = jnp.maximum(o2 * y_ref[0] + sc, 0.0).astype(o_ref.dtype)


def _se_residual_id_kernel(o2_ref, y_ref, xs_ref, o_ref):
    o2 = o2_ref[0].astype(jnp.float32)
    sc = xs_ref[0].astype(jnp.float32)
    o_ref[0] = jnp.maximum(o2 * y_ref[0] + sc, 0.0).astype(o_ref.dtype)


def se_residual(o2r, y, xs, ws=None, sc_scale=None, sc_bias=None, *, row_tile=512):
    """out = relu(o2 * y + shortcut).  o2r:(B,HW,Cout), y:(B,Cout), xs:(B,HW,Cin).
    Projection shortcut (ws given): shortcut = (xs @ ws) * sc_scale + sc_bias.
    Identity shortcut: shortcut = xs."""
    B, HW, Cout = o2r.shape
    Cin = xs.shape[-1]
    t = _pick_row_tile(HW, row_tile)
    nt = HW // t

    o2r = o2r.astype(jnp.bfloat16)
    xs = xs.astype(jnp.bfloat16)
    y3 = y.reshape(B, 1, Cout).astype(jnp.float32)

    in_specs = [
        pl.BlockSpec((1, t, Cout), lambda b, i: (b, i, 0)),
        pl.BlockSpec((1, 1, Cout), lambda b, i: (b, 0, 0)),
        pl.BlockSpec((1, t, Cin), lambda b, i: (b, i, 0)),
    ]
    args = [o2r, y3, xs]
    if ws is not None:
        in_specs += [
            pl.BlockSpec((Cin, Cout), lambda b, i: (0, 0)),
            pl.BlockSpec((1, Cout), lambda b, i: (0, 0)),
            pl.BlockSpec((1, Cout), lambda b, i: (0, 0)),
        ]
        args += [ws.astype(jnp.bfloat16),
                 sc_scale.reshape(1, Cout).astype(jnp.float32),
                 sc_bias.reshape(1, Cout).astype(jnp.float32)]
        kernel = _se_residual_proj_kernel
        flops = 2 * B * HW * Cin * Cout + 4 * B * HW * Cout
    else:
        kernel = _se_residual_id_kernel
        flops = 4 * B * HW * Cout
    bytes_accessed = int(B * HW * (2 * Cout + 2 * Cin + 4 * Cout))

    return pl.pallas_call(
        kernel,
        out_shape=jax.ShapeDtypeStruct((B, HW, Cout), jnp.float32),
        grid_spec=pltpu.PrefetchScalarGridSpec(
            num_scalar_prefetch=0,
            grid=(B, nt),
            in_specs=in_specs,
            out_specs=pl.BlockSpec((1, t, Cout), lambda b, i: (b, i, 0)),
        ),
        compiler_params=pltpu.CompilerParams(
            dimension_semantics=("parallel", "parallel"),
            vmem_limit_bytes=_VMEM_LIMIT),
        cost_estimate=pl.CostEstimate(flops=int(flops), transcendentals=0,
                                      bytes_accessed=bytes_accessed),
    )(*args)


# ----------------------------------------------------------------------------
# Block forward (glue: transposes, BN folding, weight reshapes)
# ----------------------------------------------------------------------------
def _bn_fold(bn_params, eps=1e-5):
    gamma, beta, mean, var = bn_params
    scale = gamma / jnp.sqrt(var + eps)
    bias = beta - mean * scale
    return scale, bias


def residual_se_basic_block(x_nchw, params, *, stride):
    x = jnp.transpose(x_nchw, (0, 2, 3, 1)).astype(jnp.float32)      # NHWC
    B, H, W, Cin = x.shape
    Cout = params["conv1_w"].shape[0]

    # conv1 + bn1 + relu (fused direct conv, no im2col materialization)
    w1 = jnp.transpose(params["conv1_w"], (2, 3, 1, 0)).reshape(9, Cin, Cout)
    s1, b1 = _bn_fold(params["bn1"])
    o1 = conv3x3_bn(x, w1, s1, b1, stride=stride, relu=True)         # bf16
    _, Ho, Wo, _ = o1.shape

    # conv2 + bn2 (+ per-row channel sums for the SE global average pool)
    w2 = jnp.transpose(params["conv2_w"], (2, 3, 1, 0)).reshape(9, Cout, Cout)
    s2, b2 = _bn_fold(params["bn2"])
    o2, o2_rowsum = conv3x3_bn(o1, w2, s2, b2, stride=1, relu=False,
                               emit_rowsum=True)

    # SE gate: pool (from conv2's row sums) -> fc1 -> relu -> fc2 -> sigmoid
    pooled = jnp.sum(o2_rowsum, axis=(1, 2)) / float(Ho * Wo)        # (B, Cout) f32
    y = se_fc(pooled, params["fc1_w_t"], params["fc2_w_t"])          # (B, Cout) f32

    # SE rescale + shortcut + residual add + final ReLU (fused)
    HW = Ho * Wo
    o2r = o2.reshape(B, HW, Cout)
    if stride != 1 or Cin != Cout:
        xs = x[:, ::stride, ::stride, :][:, :Ho, :Wo, :].reshape(B, HW, Cin)
        ws = jnp.transpose(params["sc_conv_w"], (2, 3, 1, 0)).reshape(Cin, Cout)
        ss, sb = _bn_fold(params["sc_bn"])
        out = se_residual(o2r, y, xs, ws, ss, sb)
    else:
        out = se_residual(o2r, y, x.reshape(B, HW, Cin))
    out = out.reshape(B, Ho, Wo, Cout)
    return jnp.transpose(out, (0, 3, 1, 2))                          # NCHW


# ----------------------------------------------------------------------------
# Deterministic parameter init (shapes follow the PyTorch module's __init__)
# ----------------------------------------------------------------------------
def init_params(key, in_planes, out_planes, reduction):
    ks = jax.random.split(key, 12)
    hidden = out_planes // reduction
    assert hidden >= 1, "out_planes must be >= reduction"

    def bn_init(k, c):
        kg, kb, km, kv = jax.random.split(k, 4)
        gamma = 1.0 + 0.1 * jax.random.normal(kg, (c,), jnp.float32)
        beta = 0.05 * jax.random.normal(kb, (c,), jnp.float32)
        mean = 0.02 * jax.random.normal(km, (c,), jnp.float32)
        var = jax.random.uniform(kv, (c,), jnp.float32, minval=0.5, maxval=1.5)
        return (gamma, beta, mean, var)

    p = {}
    p["conv1_w"] = 0.1 * jax.random.normal(ks[0], (out_planes, in_planes, 3, 3), jnp.float32)
    p["conv2_w"] = 0.1 * jax.random.normal(ks[1], (out_planes, out_planes, 3, 3), jnp.float32)
    p["bn1"] = bn_init(ks[2], out_planes)
    p["bn2"] = bn_init(ks[3], out_planes)
    p["fc1_w"] = 0.3 * jax.random.normal(ks[4], (hidden, out_planes), jnp.float32)
    p["fc2_w"] = 0.3 * jax.random.normal(ks[5], (out_planes, hidden), jnp.float32)
    p["sc_conv_w"] = 0.2 * jax.random.normal(ks[6], (out_planes, in_planes, 1, 1), jnp.float32)
    p["sc_bn"] = bn_init(ks[7], out_planes)

    # Pad the tiny SE hidden dim to a sublane-friendly size; zero columns of W1
    # give relu(0)=0 and the matching zero rows of W2 contribute nothing (exact).
    hidden_pad = max(8, _round_up(hidden, 8))
    p["fc1_w_t"] = jnp.zeros((out_planes, hidden_pad), jnp.float32).at[:, :hidden].set(p["fc1_w"].T)
    p["fc2_w_t"] = jnp.zeros((hidden_pad, out_planes), jnp.float32).at[:hidden, :].set(p["fc2_w"].T)
    return p


# ----------------------------------------------------------------------------
# Pure-JAX reference (inference-mode BN) for correctness checks
# ----------------------------------------------------------------------------
def reference_forward(x_nchw, params, stride, in_planes, out_planes, eps=1e-5):
    def conv(x, w, s, pad):
        return jax.lax.conv_general_dilated(
            x, w, window_strides=(s, s), padding=[(pad, pad), (pad, pad)],
            dimension_numbers=("NCHW", "OIHW", "NCHW"))

    def bn(x, prm):
        g, b, m, v = prm
        return (x - m[None, :, None, None]) / jnp.sqrt(v[None, :, None, None] + eps) \
            * g[None, :, None, None] + b[None, :, None, None]

    out = jax.nn.relu(bn(conv(x_nchw, params["conv1_w"], stride, 1), params["bn1"]))
    out = bn(conv(out, params["conv2_w"], 1, 1), params["bn2"])
    y = jnp.mean(out, axis=(2, 3))
    y = jax.nn.relu(y @ params["fc1_w"].T)
    y = jax.nn.sigmoid(y @ params["fc2_w"].T)
    out = out * y[:, :, None, None]
    if stride != 1 or in_planes != out_planes:
        sc = bn(conv(x_nchw, params["sc_conv_w"], stride, 0), params["sc_bn"])
    else:
        sc = x_nchw
    return jax.nn.relu(out + sc)


if __name__ == "__main__":
    # TODO(synk): BatchNorm implemented in inference mode (folded running stats);
    # PyTorch training-mode batch statistics are not reproduced.
    key = jax.random.PRNGKey(0)
    k1, k2, k3, k4 = jax.random.split(key, 4)

    # Config 1: projection shortcut (stride=2, channel expansion)
    B, Cin, H, W = 2, 16, 16, 16
    Cout, stride, reduction = 32, 2, 16
    x = jax.random.normal(k1, (B, Cin, H, W), jnp.float32)
    params = init_params(k2, Cin, Cout, reduction)
    out = jax.block_until_ready(residual_se_basic_block(x, params, stride=stride))
    assert out.shape == (B, Cout, H // stride, W // stride), out.shape
    ref = reference_forward(x, params, stride, Cin, Cout)
    np.testing.assert_allclose(np.asarray(out), np.asarray(ref), rtol=3e-2, atol=3e-2)

    # Config 2: identity shortcut (stride=1, equal channels)
    B2, C2, H2, W2 = 2, 32, 8, 8
    x2 = jax.random.normal(k3, (B2, C2, H2, W2), jnp.float32)
    params2 = init_params(k4, C2, C2, reduction)
    out2 = jax.block_until_ready(residual_se_basic_block(x2, params2, stride=1))
    assert out2.shape == (B2, C2, H2, W2), out2.shape
    ref2 = reference_forward(x2, params2, 1, C2, C2)
    np.testing.assert_allclose(np.asarray(out2), np.asarray(ref2), rtol=3e-2, atol=3e-2)

    print("KERNEL_OK")
</pallas_src>

<mosaic_0001>
module attributes {stable_mosaic.version = 11 : i64} {
  func.func @_conv3x3_bn_kernel(%arg0: i32, %arg1: i32, %arg2: memref<1x1x8x16xbf16, #tpu.memory_space<vmem>>, %arg3: memref<1x1x8x16xbf16, #tpu.memory_space<vmem>>, %arg4: memref<1x1x8x16xbf16, #tpu.memory_space<vmem>>, %arg5: memref<1x1x8x16xbf16, #tpu.memory_space<vmem>>, %arg6: memref<1x1x8x16xbf16, #tpu.memory_space<vmem>>, %arg7: memref<1x1x8x16xbf16, #tpu.memory_space<vmem>>, %arg8: memref<1x1x8x16xbf16, #tpu.memory_space<vmem>>, %arg9: memref<1x1x8x16xbf16, #tpu.memory_space<vmem>>, %arg10: memref<1x1x8x16xbf16, #tpu.memory_space<vmem>>, %arg11: memref<9x16x32xbf16, #tpu.memory_space<vmem>>, %arg12: memref<1x32xf32, #tpu.memory_space<vmem>>, %arg13: memref<1x32xf32, #tpu.memory_space<vmem>>, %arg14: memref<1x1x8x32xbf16, #tpu.memory_space<vmem>>) attributes {dimension_semantics = [#tpu.dimension_semantics<parallel>, #tpu.dimension_semantics<parallel>], iteration_bounds = array<i64: 2, 8>, scalar_prefetch = 0 : i64, scratch_operands = 0 : i64, tpu.core_type = #tpu.core_type<tc>, window_params = [{transform_indices = @transform_0, window_bounds = array<i64: 1, 1, 8, 16>}, {transform_indices = @transform_1, window_bounds = array<i64: 1, 1, 8, 16>}, {transform_indices = @transform_2, window_bounds = array<i64: 1, 1, 8, 16>}, {transform_indices = @transform_3, window_bounds = array<i64: 1, 1, 8, 16>}, {transform_indices = @transform_4, window_bounds = array<i64: 1, 1, 8, 16>}, {transform_indices = @transform_5, window_bounds = array<i64: 1, 1, 8, 16>}, {transform_indices = @transform_6, window_bounds = array<i64: 1, 1, 8, 16>}, {transform_indices = @transform_7, window_bounds = array<i64: 1, 1, 8, 16>}, {transform_indices = @transform_8, window_bounds = array<i64: 1, 1, 8, 16>}, {pipeline_mode = #tpu.pipeline_mode<synchronous>, transform_indices = @transform_9, window_bounds = array<i64: 9, 16, 32>}, {pipeline_mode = #tpu.pipeline_mode<synchronous>, transform_indices = @transform_10, window_bounds = array<i64: 1, 32>}, {pipeline_mode = #tpu.pipeline_mode<synchronous>, transform_indices = @transform_11, window_bounds = array<i64: 1, 32>}, {transform_indices = @transform_12, window_bounds = array<i64: 1, 1, 8, 32>}]} {
    %cst = arith.constant 0.000000e+00 : f32
    %0 = vector.broadcast %cst : f32 to vector<8x32xf32>
    %c0 = arith.constant 0 : index
    %c0_0 = arith.constant 0 : index
    %c0_1 = arith.constant 0 : index
    %c0_2 = arith.constant 0 : index
    %1 = vector.load %arg2[%c0, %c0_0, %c0_1, %c0_2] : memref<1x1x8x16xbf16, #tpu.memory_space<vmem>>, vector<1x1x8x16xbf16>
    %2 = vector.shape_cast %1 : vector<1x1x8x16xbf16> to vector<8x16xbf16>
    %c0_3 = arith.constant 0 : index
    %c0_4 = arith.constant 0 : index
    %c0_5 = arith.constant 0 : index
    %3 = vector.load %arg11[%c0_3, %c0_4, %c0_5] : memref<9x16x32xbf16, #tpu.memory_space<vmem>>, vector<1x16x32xbf16>
    %4 = vector.shape_cast %3 : vector<1x16x32xbf16> to vector<16x32xbf16>
    %cst_6 = arith.constant dense<0.000000e+00> : vector<8x32xf32>
    %5 = tpu.matmul %2, %4, %cst_6 {dimension_numbers = #tpu.dot_dimension_numbers<[1], [0], [0], [1], [0, 0, 1, 1], [], []>} : vector<8x16xbf16>, vector<16x32xbf16>, vector<8x32xf32> -> vector<8x32xf32>
    %6 = arith.addf %0, %5 : vector<8x32xf32>
    %c0_7 = arith.constant 0 : index
    %c0_8 = arith.constant 0 : index
    %c0_9 = arith.constant 0 : index
    %c0_10 = arith.constant 0 : index
    %7 = vector.load %arg3[%c0_7, %c0_8, %c0_9, %c0_10] : memref<1x1x8x16xbf16, #tpu.memory_space<vmem>>, vector<1x1x8x16xbf16>
    %8 = vector.shape_cast %7 : vector<1x1x8x16xbf16> to vector<8x16xbf16>
    %c1 = arith.constant 1 : index
    %c0_11 = arith.constant 0 : index
    %c0_12 = arith.constant 0 : index
    %9 = vector.load %arg11[%c1, %c0_11, %c0_12] : memref<9x16x32xbf16, #tpu.memory_space<vmem>>, vector<1x16x32xbf16>
    %10 = vector.shape_cast %9 : vector<1x16x32xbf16> to vector<16x32xbf16>
    %cst_13 = arith.constant dense<0.000000e+00> : vector<8x32xf32>
    %11 = tpu.matmul %8, %10, %cst_13 {dimension_numbers = #tpu.dot_dimension_numbers<[1], [0], [0], [1], [0, 0, 1, 1], [], []>} : vector<8x16xbf16>, vector<16x32xbf16>, vector<8x32xf32> -> vector<8x32xf32>
    %12 = arith.addf %6, %11 : vector<8x32xf32>
    %c0_14 = arith.constant 0 : index
    %c0_15 = arith.constant 0 : index
    %c0_16 = arith.constant 0 : index
    %c0_17 = arith.constant 0 : index
    %13 = vector.load %arg4[%c0_14, %c0_15, %c0_16, %c0_17] : memref<1x1x8x16xbf16, #tpu.memory_space<vmem>>, vector<1x1x8x16xbf16>
    %14 = vector.shape_cast %13 : vector<1x1x8x16xbf16> to vector<8x16xbf16>
    %c2 = arith.constant 2 : index
    %c0_18 = arith.constant 0 : index
    %c0_19 = arith.constant 0 : index
    %15 = vector.load %arg11[%c2, %c0_18, %c0_19] : memref<9x16x32xbf16, #tpu.memory_space<vmem>>, vector<1x16x32xbf16>
    %16 = vector.shape_cast %15 : vector<1x16x32xbf16> to vector<16x32xbf16>
    %cst_20 = arith.constant dense<0.000000e+00> : vector<8x32xf32>
    %17 = tpu.matmul %14, %16, %cst_20 {dimension_numbers = #tpu.dot_dimension_numbers<[1], [0], [0], [1], [0, 0, 1, 1], [], []>} : vector<8x16xbf16>, vector<16x32xbf16>, vector<8x32xf32> -> vector<8x32xf32>
    %18 = arith.addf %12, %17 : vector<8x32xf32>
    %c0_21 = arith.constant 0 : index
    %c0_22 = arith.constant 0 : index
    %c0_23 = arith.constant 0 : index
    %c0_24 = arith.constant 0 : index
    %19 = vector.load %arg5[%c0_21, %c0_22, %c0_23, %c0_24] : memref<1x1x8x16xbf16, #tpu.memory_space<vmem>>, vector<1x1x8x16xbf16>
    %20 = vector.shape_cast %19 : vector<1x1x8x16xbf16> to vector<8x16xbf16>
    %c3 = arith.constant 3 : index
    %c0_25 = arith.constant 0 : index
    %c0_26 = arith.constant 0 : index
    %21 = vector.load %arg11[%c3, %c0_25, %c0_26] : memref<9x16x32xbf16, #tpu.memory_space<vmem>>, vector<1x16x32xbf16>
    %22 = vector.shape_cast %21 : vector<1x16x32xbf16> to vector<16x32xbf16>
    %cst_27 = arith.constant dense<0.000000e+00> : vector<8x32xf32>
    %23 = tpu.matmul %20, %22, %cst_27 {dimension_numbers = #tpu.dot_dimension_numbers<[1], [0], [0], [1], [0, 0, 1, 1], [], []>} : vector<8x16xbf16>, vector<16x32xbf16>, vector<8x32xf32> -> vector<8x32xf32>
    %24 = arith.addf %18, %23 : vector<8x32xf32>
    %c0_28 = arith.constant 0 : index
    %c0_29 = arith.constant 0 : index
    %c0_30 = arith.constant 0 : index
    %c0_31 = arith.constant 0 : index
    %25 = vector.load %arg6[%c0_28, %c0_29, %c0_30, %c0_31] : memref<1x1x8x16xbf16, #tpu.memory_space<vmem>>, vector<1x1x8x16xbf16>
    %26 = vector.shape_cast %25 : vector<1x1x8x16xbf16> to vector<8x16xbf16>
    %c4 = arith.constant 4 : index
    %c0_32 = arith.constant 0 : index
    %c0_33 = arith.constant 0 : index
    %27 = vector.load %arg11[%c4, %c0_32, %c0_33] : memref<9x16x32xbf16, #tpu.memory_space<vmem>>, vector<1x16x32xbf16>
    %28 = vector.shape_cast %27 : vector<1x16x32xbf16> to vector<16x32xbf16>
    %cst_34 = arith.constant dense<0.000000e+00> : vector<8x32xf32>
    %29 = tpu.matmul %26, %28, %cst_34 {dimension_numbers = #tpu.dot_dimension_numbers<[1], [0], [0], [1], [0, 0, 1, 1], [], []>} : vector<8x16xbf16>, vector<16x32xbf16>, vector<8x32xf32> -> vector<8x32xf32>
    %30 = arith.addf %24, %29 : vector<8x32xf32>
    %c0_35 = arith.constant 0 : index
    %c0_36 = arith.constant 0 : index
    %c0_37 = arith.constant 0 : index
    %c0_38 = arith.constant 0 : index
    %31 = vector.load %arg7[%c0_35, %c0_36, %c0_37, %c0_38] : memref<1x1x8x16xbf16, #tpu.memory_space<vmem>>, vector<1x1x8x16xbf16>
    %32 = vector.shape_cast %31 : vector<1x1x8x16xbf16> to vector<8x16xbf16>
    %c5 = arith.constant 5 : index
    %c0_39 = arith.constant 0 : index
    %c0_40 = arith.constant 0 : index
    %33 = vector.load %arg11[%c5, %c0_39, %c0_40] : memref<9x16x32xbf16, #tpu.memory_space<vmem>>, vector<1x16x32xbf16>
    %34 = vector.shape_cast %33 : vector<1x16x32xbf16> to vector<16x32xbf16>
    %cst_41 = arith.constant dense<0.000000e+00> : vector<8x32xf32>
    %35 = tpu.matmul %32, %34, %cst_41 {dimension_numbers = #tpu.dot_dimension_numbers<[1], [0], [0], [1], [0, 0, 1, 1], [], []>} : vector<8x16xbf16>, vector<16x32xbf16>, vector<8x32xf32> -> vector<8x32xf32>
    %36 = arith.addf %30, %35 : vector<8x32xf32>
    %c0_42 = arith.constant 0 : index
    %c0_43 = arith.constant 0 : index
    %c0_44 = arith.constant 0 : index
    %c0_45 = arith.constant 0 : index
    %37 = vector.load %arg8[%c0_42, %c0_43, %c0_44, %c0_45] : memref<1x1x8x16xbf16, #tpu.memory_space<vmem>>, vector<1x1x8x16xbf16>
    %38 = vector.shape_cast %37 : vector<1x1x8x16xbf16> to vector<8x16xbf16>
    %c6 = arith.constant 6 : index
    %c0_46 = arith.constant 0 : index
    %c0_47 = arith.constant 0 : index
    %39 = vector.load %arg11[%c6, %c0_46, %c0_47] : memref<9x16x32xbf16, #tpu.memory_space<vmem>>, vector<1x16x32xbf16>
    %40 = vector.shape_cast %39 : vector<1x16x32xbf16> to vector<16x32xbf16>
    %cst_48 = arith.constant dense<0.000000e+00> : vector<8x32xf32>
    %41 = tpu.matmul %38, %40, %cst_48 {dimension_numbers = #tpu.dot_dimension_numbers<[1], [0], [0], [1], [0, 0, 1, 1], [], []>} : vector<8x16xbf16>, vector<16x32xbf16>, vector<8x32xf32> -> vector<8x32xf32>
    %42 = arith.addf %36, %41 : vector<8x32xf32>
    %c0_49 = arith.constant 0 : index
    %c0_50 = arith.constant 0 : index
    %c0_51 = arith.constant 0 : index
    %c0_52 = arith.constant 0 : index
    %43 = vector.load %arg9[%c0_49, %c0_50, %c0_51, %c0_52] : memref<1x1x8x16xbf16, #tpu.memory_space<vmem>>, vector<1x1x8x16xbf16>
    %44 = vector.shape_cast %43 : vector<1x1x8x16xbf16> to vector<8x16xbf16>
    %c7 = arith.constant 7 : index
    %c0_53 = arith.constant 0 : index
    %c0_54 = arith.constant 0 : index
    %45 = vector.load %arg11[%c7, %c0_53, %c0_54] : memref<9x16x32xbf16, #tpu.memory_space<vmem>>, vector<1x16x32xbf16>
    %46 = vector.shape_cast %45 : vector<1x16x32xbf16> to vector<16x32xbf16>
    %cst_55 = arith.constant dense<0.000000e+00> : vector<8x32xf32>
    %47 = tpu.matmul %44, %46, %cst_55 {dimension_numbers = #tpu.dot_dimension_numbers<[1], [0], [0], [1], [0, 0, 1, 1], [], []>} : vector<8x16xbf16>, vector<16x32xbf16>, vector<8x32xf32> -> vector<8x32xf32>
    %48 = arith.addf %42, %47 : vector<8x32xf32>
    %c0_56 = arith.constant 0 : index
    %c0_57 = arith.constant 0 : index
    %c0_58 = arith.constant 0 : index
    %c0_59 = arith.constant 0 : index
    %49 = vector.load %arg10[%c0_56, %c0_57, %c0_58, %c0_59] : memref<1x1x8x16xbf16, #tpu.memory_space<vmem>>, vector<1x1x8x16xbf16>
    %50 = vector.shape_cast %49 : vector<1x1x8x16xbf16> to vector<8x16xbf16>
    %c8 = arith.constant 8 : index
    %c0_60 = arith.constant 0 : index
    %c0_61 = arith.constant 0 : index
    %51 = vector.load %arg11[%c8, %c0_60, %c0_61] : memref<9x16x32xbf16, #tpu.memory_space<vmem>>, vector<1x16x32xbf16>
    %52 = vector.shape_cast %51 : vector<1x16x32xbf16> to vector<16x32xbf16>
    %cst_62 = arith.constant dense<0.000000e+00> : vector<8x32xf32>
    %53 = tpu.matmul %50, %52, %cst_62 {dimension_numbers = #tpu.dot_dimension_numbers<[1], [0], [0], [1], [0, 0, 1, 1], [], []>} : vector<8x16xbf16>, vector<16x32xbf16>, vector<8x32xf32> -> vector<8x32xf32>
    %54 = arith.addf %48, %53 : vector<8x32xf32>
    %c0_63 = arith.constant 0 : index
    %c0_64 = arith.constant 0 : index
    %55 = vector.load %arg12[%c0_63, %c0_64] : memref<1x32xf32, #tpu.memory_space<vmem>>, vector<1x32xf32>
    %56 = vector.broadcast %55 : vector<1x32xf32> to vector<8x32xf32>
    %57 = arith.mulf %54, %56 : vector<8x32xf32>
    %c0_65 = arith.constant 0 : index
    %c0_66 = arith.constant 0 : index
    %58 = vector.load %arg13[%c0_65, %c0_66] : memref<1x32xf32, #tpu.memory_space<vmem>>, vector<1x32xf32>
    %59 = vector.broadcast %58 : vector<1x32xf32> to vector<8x32xf32>
    %60 = arith.addf %57, %59 : vector<8x32xf32>
    %cst_67 = arith.constant 0.000000e+00 : f32
    %61 = vector.broadcast %cst_67 : f32 to vector<8x32xf32>
    %62 = arith.maximumf %60, %61 : vector<8x32xf32>
    %63 = arith.truncf %62 : vector<8x32xf32> to vector<8x32xbf16>
    %c0_68 = arith.constant 0 : index
    %c0_69 = arith.constant 0 : index
    %c0_70 = arith.constant 0 : index
    %c0_71 = arith.constant 0 : index
    %64 = vector.load %arg14[%c0_68, %c0_69, %c0_70, %c0_71] : memref<1x1x8x32xbf16, #tpu.memory_space<vmem>>, vector<1x1x8x32xbf16>
    %65 = vector.shape_cast %64 : vector<1x1x8x32xbf16> to vector<8x32xbf16>
    %66 = vector.shape_cast %63 : vector<8x32xbf16> to vector<1x1x8x32xbf16>
    tpu.vector_store %arg14[%c0_68, %c0_69, %c0_70, %c0_71], %66 {strides = array<i32>} : memref<1x1x8x32xbf16, #tpu.memory_space<vmem>>, vector<1x1x8x32xbf16>,
    return
  }
  func.func @transform_0(%arg0: i32, %arg1: i32) -> (i32, i32, i32, i32) {
    %c2_i32 = arith.constant 2 : i32
    %0 = arith.muli %arg1, %c2_i32 : i32
    %c0_i32 = arith.constant 0 : i32
    %1 = arith.addi %0, %c0_i32 : i32
    %c0_i32_0 = arith.constant 0 : i32
    %c0_i32_1 = arith.constant 0 : i32
    %c0_i32_2 = arith.constant 0 : i32
    return %arg0, %1, %c0_i32_0, %c0_i32_1 : i32, i32, i32, i32
  }
  func.func @transform_1(%arg0: i32, %arg1: i32) -> (i32, i32, i32, i32) {
    %c2_i32 = arith.constant 2 : i32
    %0 = arith.muli %arg1, %c2_i32 : i32
    %c0_i32 = arith.constant 0 : i32
    %1 = arith.addi %0, %c0_i32 : i32
    %c0_i32_0 = arith.constant 0 : i32
    %c0_i32_1 = arith.constant 0 : i32
    %c0_i32_2 = arith.constant 0 : i32
    return %arg0, %1, %c0_i32_0, %c0_i32_1 : i32, i32, i32, i32
  }
  func.func @transform_2(%arg0: i32, %arg1: i32) -> (i32, i32, i32, i32) {
    %c2_i32 = arith.constant 2 : i32
    %0 = arith.muli %arg1, %c2_i32 : i32
    %c0_i32 = arith.constant 0 : i32
    %1 = arith.addi %0, %c0_i32 : i32
    %c0_i32_0 = arith.constant 0 : i32
    %c0_i32_1 = arith.constant 0 : i32
    %c0_i32_2 = arith.constant 0 : i32
    return %arg0, %1, %c0_i32_0, %c0_i32_1 : i32, i32, i32, i32
  }
  func.func @transform_3(%arg0: i32, %arg1: i32) -> (i32, i32, i32, i32) {
    %c2_i32 = arith.constant 2 : i32
    %0 = arith.muli %arg1, %c2_i32 : i32
    %c1_i32 = arith.constant 1 : i32
    %1 = arith.addi %0, %c1_i32 : i32
    %c0_i32 = arith.constant 0 : i32
    %c0_i32_0 = arith.constant 0 : i32
    %c0_i32_1 = arith.constant 0 : i32
    return %arg0, %1, %c0_i32, %c0_i32_0 : i32, i32, i32, i32
  }
  func.func @transform_4(%arg0: i32, %arg1: i32) -> (i32, i32, i32, i32) {
    %c2_i32 = arith.constant 2 : i32
    %0 = arith.muli %arg1, %c2_i32 : i32
    %c1_i32 = arith.constant 1 : i32
    %1 = arith.addi %0, %c1_i32 : i32
    %c0_i32 = arith.constant 0 : i32
    %c0_i32_0 = arith.constant 0 : i32
    %c0_i32_1 = arith.constant 0 : i32
    return %arg0, %1, %c0_i32, %c0_i32_0 : i32, i32, i32, i32
  }
  func.func @transform_5(%arg0: i32, %arg1: i32) -> (i32, i32, i32, i32) {
    %c2_i32 = arith.constant 2 : i32
    %0 = arith.muli %arg1, %c2_i32 : i32
    %c1_i32 = arith.constant 1 : i32
    %1 = arith.addi %0, %c1_i32 : i32
    %c0_i32 = arith.constant 0 : i32
    %c0_i32_0 = arith.constant 0 : i32
    %c0_i32_1 = arith.constant 0 : i32
    return %arg0, %1, %c0_i32, %c0_i32_0 : i32, i32, i32, i32
  }
  func.func @transform_6(%arg0: i32, %arg1: i32) -> (i32, i32, i32, i32) {
    %c2_i32 = arith.constant 2 : i32
    %0 = arith.muli %arg1, %c2_i32 : i32
    %c2_i32_0 = arith.constant 2 : i32
    %1 = arith.addi %0, %c2_i32_0 : i32
    %c0_i32 = arith.constant 0 : i32
    %c0_i32_1 = arith.constant 0 : i32
    %c0_i32_2 = arith.constant 0 : i32
    return %arg0, %1, %c0_i32, %c0_i32_1 : i32, i32, i32, i32
  }
  func.func @transform_7(%arg0: i32, %arg1: i32) -> (i32, i32, i32, i32) {
    %c2_i32 = arith.constant 2 : i32
    %0 = arith.muli %arg1, %c2_i32 : i32
    %c2_i32_0 = arith.constant 2 : i32
    %1 = arith.addi %0, %c2_i32_0 : i32
    %c0_i32 = arith.constant 0 : i32
    %c0_i32_1 = arith.constant 0 : i32
    %c0_i32_2 = arith.constant 0 : i32
    return %arg0, %1, %c0_i32, %c0_i32_1 : i32, i32, i32, i32
  }
  func.func @transform_8(%arg0: i32, %arg1: i32) -> (i32, i32, i32, i32) {
    %c2_i32 = arith.constant 2 : i32
    %0 = arith.muli %arg1, %c2_i32 : i32
    %c2_i32_0 = arith.constant 2 : i32
    %1 = arith.addi %0, %c2_i32_0 : i32
    %c0_i32 = arith.constant 0 : i32
    %c0_i32_1 = arith.constant 0 : i32
    %c0_i32_2 = arith.constant 0 : i32
    return %arg0, %1, %c0_i32, %c0_i32_1 : i32, i32, i32, i32
  }
  func.func @transform_9(%arg0: i32, %arg1: i32) -> (i32, i32, i32) {
    %c0_i32 = arith.constant 0 : i32
    %c0_i32_0 = arith.constant 0 : i32
    %c0_i32_1 = arith.constant 0 : i32
    %c0_i32_2 = arith.constant 0 : i32
    return %c0_i32, %c0_i32_0, %c0_i32_1 : i32, i32, i32
  }
  func.func @transform_10(%arg0: i32, %arg1: i32) -> (i32, i32) {
    %c0_i32 = arith.constant 0 : i32
    %c0_i32_0 = arith.constant 0 : i32
    %c0_i32_1 = arith.constant 0 : i32
    return %c0_i32, %c0_i32_0 : i32, i32
  }
  func.func @transform_11(%arg0: i32, %arg1: i32) -> (i32, i32) {
    %c0_i32 = arith.constant 0 : i32
    %c0_i32_0 = arith.constant 0 : i32
    %c0_i32_1 = arith.constant 0 : i32
    return %c0_i32, %c0_i32_0 : i32, i32
  }
  func.func @transform_12(%arg0: i32, %arg1: i32) -> (i32, i32, i32, i32) {
    %c0_i32 = arith.constant 0 : i32
    %c0_i32_0 = arith.constant 0 : i32
    %c0_i32_1 = arith.constant 0 : i32
    return %arg0, %arg1, %c0_i32, %c0_i32_0 : i32, i32, i32, i32
  }
}

</mosaic_0001>

<llo_original>
// kernel: tpu_custom_call.1
$region0: #{tpu_custom_call.1}
  #allocation0 [shape = 'u32[]', space=smem, size = 0x4, offset = 0x4, fixed_abs, tag = 'smem constant byte address 0x4 - core index']
  #allocation1 [shape = 'u32[144,128]{1,0:T(1,128)}', space=vmem, size = 0x12000, scoped, tag = 'internal scratch']
  %s0 = inlined_call_operand.vmem [shape: bf16[2,18,8,16], index: 0, kind: input, shape index: {}]
  %s1 = inlined_call_operand.vmem [shape: bf16[2,18,8,16], index: 1, kind: input, shape index: {}]
  %s2 = inlined_call_operand.vmem [shape: bf16[2,18,8,16], index: 2, kind: input, shape index: {}]
  %s3 = inlined_call_operand.vmem [shape: bf16[2,18,8,16], index: 3, kind: input, shape index: {}]
  %s4 = inlined_call_operand.vmem [shape: bf16[2,18,8,16], index: 4, kind: input, shape index: {}]
  %s5 = inlined_call_operand.vmem [shape: bf16[2,18,8,16], index: 5, kind: input, shape index: {}]
  %s6 = inlined_call_operand.vmem [shape: bf16[2,18,8,16], index: 6, kind: input, shape index: {}]
  %s7 = inlined_call_operand.vmem [shape: bf16[2,18,8,16], index: 7, kind: input, shape index: {}]
  %s8 = inlined_call_operand.vmem [shape: bf16[2,18,8,16], index: 8, kind: input, shape index: {}]
  %s9 = inlined_call_operand.vmem [shape: bf16[9,16,32], index: 9, kind: input, shape index: {}]
  %s10 = inlined_call_operand.vmem [shape: f32[1,32], index: 10, kind: input, shape index: {}]
  %s11 = inlined_call_operand.vmem [shape: f32[1,32], index: 11, kind: input, shape index: {}]
  %s12 = inlined_call_operand.hbm [shape: bf16[2,8,8,32], index: 12, kind: output, shape index: {}]
  %s13 = sld [smem:[#allocation0]]
  $region81: #{tpu_custom_call.1} parent=0
    _
  %s15 = ssub.s32 1, %s13
  %s16 = scalar_select 0, %s15, %s13
  $region1: #{tpu_custom_call.1} parent=0
    #allocation2 [shape = 'u8[4096]{0}', space=vmem, size = 0x1000, scoped, tag = 'output window, operand 0']
    #allocation3 [shape = 's32[2]{0}', space=sflag, size = 0x8, scoped, tag = 'scoped memory for tpu_custom_call.1']
    %17 = vsyncpa [#allocation3], 0
    %s18 = scalar_lea.sflag [#allocation3], 1
    %19 = vsyncpa %s18, 0
    loop: start=0, step=1, limit=18
    $region2: #{tpu_custom_call.1} parent=1 // loop_pre_header
      _
    $region3: #{tpu_custom_call.1} parent=1 // loop_header
      %s21 = sphi 0, %s25
      %p22 = scmp.ge.s32.totalorder %s21, 18
      %s28 = sphi 0, %s40
      %s29 = sphi 0, %s36
      %s30 = sphi 0, %s28
      %s31 = sphi 0, %s29
      %s32 = sphi 0, %s30
      %s33 = sphi 0, %s31
      %s47 = sphi 0, %s49
      %s50 = sphi 0, %s47
      %s51 = sphi 0, %s50
      %s67 = sphi 0, %s51
      %s77 = sphi 0, %s79
      %s80 = sphi 0, %s77
      %s81 = sphi 0, %s80
      %s97 = sphi 0, %s81
      %s107 = sphi 0, %s109
      %s110 = sphi 0, %s107
      %s111 = sphi 0, %s110
      %s127 = sphi 0, %s111
      %s139 = sphi 0, %s141
      %s142 = sphi 0, %s139
      %s143 = sphi 0, %s142
      %s159 = sphi 0, %s143
      %s171 = sphi 0, %s173
      %s174 = sphi 0, %s171
      %s175 = sphi 0, %s174
      %s191 = sphi 0, %s175
      %s203 = sphi 0, %s205
      %s206 = sphi 0, %s203
      %s207 = sphi 0, %s206
      %s223 = sphi 0, %s207
      %s235 = sphi 0, %s237
      %s238 = sphi 0, %s235
      %s239 = sphi 0, %s238
      %s255 = sphi 0, %s239
      %s267 = sphi 0, %s269
      %s270 = sphi 0, %s267
      %s271 = sphi 0, %s270
      %s287 = sphi 0, %s271
      %s299 = sphi 0, %s301
      %s302 = sphi 0, %s299
      %s303 = sphi 0, %s302
      %s319 = sphi 0, %s303
      %s323 = sphi 0, %s323
      %s325 = sphi 0, %s323
      %s326 = sphi 0, %s325
      %s340 = sphi 0, %s326
      %s344 = sphi 0, %s344
      %s346 = sphi 0, %s344
      %s347 = sphi 0, %s346
      %s361 = sphi 0, %s347
      %s365 = sphi 0, %s365
      %s367 = sphi 0, %s365
      %s368 = sphi 0, %s367
      %s382 = sphi 0, %s368
      %s390 = sphi 0, %s392
      %s393 = sphi 0, %s390
      %s394 = sphi 0, %s393
      %s410 = sphi 0, %s394
    $region4: #{tpu_custom_call.1} parent=1 // loop_header_branch
      %24 = sbr.rel (%p22) target = $region8
    $region5: #{tpu_custom_call.1} parent=1 // loop_body
      %s26 = ssub.s32 %s21, 1
      %s27 = ssub.s32 %s21, 2
      %s34 = sadd.s32 1, %s29
      %p35 = scmp.ge.s32.totalorder %s34, 8
      %s36 = scalar_select %p35, 0, %s34
      %s37 = sadd.s32 1, %s28
      %s38 = scalar_select %p35, %s37, %s28
      %p39 = scmp.ge.s32.totalorder %s38, 2
      %s40 = scalar_select %p39, 0, %s38
      %s41 = smul.u32 %s29, 2
      %s42 = smul.u32 %s36, 2
      %s43 = ssub.s32 %s28, %s40
      %s44 = ssub.s32 %s41, %s42
      %s45 = sor.u32 %s43, %s44
      %p46 = scmp.eq.s32.totalorder %s45, 0
      %s48 = sadd.s32 %s47, 1
      %s49 = scalar_select %p46, %s47, %s48
      %p52 = pneg %p46
      %p53 = scmp.eq.s32.totalorder %s21, 15
      %p54 = por %p52, %p53
      %p55 = scmp.ne.s32.totalorder %s47, %s50
      %p56 = scmp.eq.s32.totalorder %s21, 0
      %p57 = por %p55, %p56
      %p58 = scmp.ne.s32.totalorder %s47, %s50
      %p59 = scmp.eq.s32.totalorder %s26, 15
      %p60 = por %p58, %p59
      %p61 = scmp.ne.s32.totalorder %s50, %s51
      %p62 = scmp.eq.s32.totalorder %s26, 0
      %p63 = por %p61, %p62
      %p64 = scmp.ne.s32.totalorder %s50, %s51
      %p65 = scmp.eq.s32.totalorder %s27, 15
      %p66 = por %p64, %p65
      %p68 = scmp.ne.s32.totalorder %s51, %s67
      %p69 = scmp.eq.s32.totalorder %s27, 0
      %p70 = por %p68, %p69
      %s71 = smul.u32 %s29, 2
      %s72 = smul.u32 %s36, 2
      %s73 = ssub.s32 %s28, %s40
      %s74 = ssub.s32 %s71, %s72
      %s75 = sor.u32 %s73, %s74
      %p76 = scmp.eq.s32.totalorder %s75, 0
      %s78 = sadd.s32 %s77, 1
      %s79 = scalar_select %p76, %s77, %s78
      %p82 = pneg %p76
      %p83 = scmp.eq.s32.totalorder %s21, 15
      %p84 = por %p82, %p83
      %p85 = scmp.ne.s32.totalorder %s77, %s80
      %p86 = scmp.eq.s32.totalorder %s21, 0
      %p87 = por %p85, %p86
      %p88 = scmp.ne.s32.totalorder %s77, %s80
      %p89 = scmp.eq.s32.totalorder %s26, 15
      %p90 = por %p88, %p89
      %p91 = scmp.ne.s32.totalorder %s80, %s81
      %p92 = scmp.eq.s32.totalorder %s26, 0
      %p93 = por %p91, %p92
      %p94 = scmp.ne.s32.totalorder %s80, %s81
      %p95 = scmp.eq.s32.totalorder %s27, 15
      %p96 = por %p94, %p95
      %p98 = scmp.ne.s32.totalorder %s81, %s97
      %p99 = scmp.eq.s32.totalorder %s27, 0
      %p100 = por %p98, %p99
      %s101 = smul.u32 %s29, 2
      %s102 = smul.u32 %s36, 2
      %s103 = ssub.s32 %s28, %s40
      %s104 = ssub.s32 %s101, %s102
      %s105 = sor.u32 %s103, %s104
      %p106 = scmp.eq.s32.totalorder %s105, 0
      %s108 = sadd.s32 %s107, 1
      %s109 = scalar_select %p106, %s107, %s108
      %p112 = pneg %p106
      %p113 = scmp.eq.s32.totalorder %s21, 15
      %p114 = por %p112, %p113
      %p115 = scmp.ne.s32.totalorder %s107, %s110
      %p116 = scmp.eq.s32.totalorder %s21, 0
      %p117 = por %p115, %p116
      %p118 = scmp.ne.s32.totalorder %s107, %s110
      %p119 = scmp.eq.s32.totalorder %s26, 15
      %p120 = por %p118, %p119
      %p121 = scmp.ne.s32.totalorder %s110, %s111
      %p122 = scmp.eq.s32.totalorder %s26, 0
      %p123 = por %p121, %p122
      %p124 = scmp.ne.s32.totalorder %s110, %s111
      %p125 = scmp.eq.s32.totalorder %s27, 15
      %p126 = por %p124, %p125
      %p128 = scmp.ne.s32.totalorder %s111, %s127
      %p129 = scmp.eq.s32.totalorder %s27, 0
      %p130 = por %p128, %p129
      %s131 = smul.u32 %s29, 2
      %s132 = sadd.s32 %s131, 1
      %s133 = smul.u32 %s36, 2
      %s134 = sadd.s32 %s133, 1
      %s135 = ssub.s32 %s28, %s40
      %s136 = ssub.s32 %s132, %s134
      %s137 = sor.u32 %s135, %s136
      %p138 = scmp.eq.s32.totalorder %s137, 0
      %s140 = sadd.s32 %s139, 1
      %s141 = scalar_select %p138, %s139, %s140
      %p144 = pneg %p138
      %p145 = scmp.eq.s32.totalorder %s21, 15
      %p146 = por %p144, %p145
      %p147 = scmp.ne.s32.totalorder %s139, %s142
      %p148 = scmp.eq.s32.totalorder %s21, 0
      %p149 = por %p147, %p148
      %p150 = scmp.ne.s32.totalorder %s139, %s142
      %p151 = scmp.eq.s32.totalorder %s26, 15
      %p152 = por %p150, %p151
      %p153 = scmp.ne.s32.totalorder %s142, %s143
      %p154 = scmp.eq.s32.totalorder %s26, 0
      %p155 = por %p153, %p154
      %p156 = scmp.ne.s32.totalorder %s142, %s143
      %p157 = scmp.eq.s32.totalorder %s27, 15
      %p158 = por %p156, %p157
      %p160 = scmp.ne.s32.totalorder %s143, %s159
      %p161 = scmp.eq.s32.totalorder %s27, 0
      %p162 = por %p160, %p161
      %s163 = smul.u32 %s29, 2
      %s164 = sadd.s32 %s163, 1
      %s165 = smul.u32 %s36, 2
      %s166 = sadd.s32 %s165, 1
      %s167 = ssub.s32 %s28, %s40
      %s168 = ssub.s32 %s164, %s166
      %s169 = sor.u32 %s167, %s168
      %p170 = scmp.eq.s32.totalorder %s169, 0
      %s172 = sadd.s32 %s171, 1
      %s173 = scalar_select %p170, %s171, %s172
      %p176 = pneg %p170
      %p177 = scmp.eq.s32.totalorder %s21, 15
      %p178 = por %p176, %p177
      %p179 = scmp.ne.s32.totalorder %s171, %s174
      %p180 = scmp.eq.s32.totalorder %s21, 0
      %p181 = por %p179, %p180
      %p182 = scmp.ne.s32.totalorder %s171, %s174
      %p183 = scmp.eq.s32.totalorder %s26, 15
      %p184 = por %p182, %p183
      %p185 = scmp.ne.s32.totalorder %s174, %s175
      %p186 = scmp.eq.s32.totalorder %s26, 0
      %p187 = por %p185, %p186
      %p188 = scmp.ne.s32.totalorder %s174, %s175
      %p189 = scmp.eq.s32.totalorder %s27, 15
      %p190 = por %p188, %p189
      %p192 = scmp.ne.s32.totalorder %s175, %s191
      %p193 = scmp.eq.s32.totalorder %s27, 0
      %p194 = por %p192, %p193
      %s195 = smul.u32 %s29, 2
      %s196 = sadd.s32 %s195, 1
      %s197 = smul.u32 %s36, 2
      %s198 = sadd.s32 %s197, 1
      %s199 = ssub.s32 %s28, %s40
      %s200 = ssub.s32 %s196, %s198
      %s201 = sor.u32 %s199, %s200
      %p202 = scmp.eq.s32.totalorder %s201, 0
      %s204 = sadd.s32 %s203, 1
      %s205 = scalar_select %p202, %s203, %s204
      %p208 = pneg %p202
      %p209 = scmp.eq.s32.totalorder %s21, 15
      %p210 = por %p208, %p209
      %p211 = scmp.ne.s32.totalorder %s203, %s206
      %p212 = scmp.eq.s32.totalorder %s21, 0
      %p213 = por %p211, %p212
      %p214 = scmp.ne.s32.totalorder %s203, %s206
      %p215 = scmp.eq.s32.totalorder %s26, 15
      %p216 = por %p214, %p215
      %p217 = scmp.ne.s32.totalorder %s206, %s207
      %p218 = scmp.eq.s32.totalorder %s26, 0
      %p219 = por %p217, %p218
      %p220 = scmp.ne.s32.totalorder %s206, %s207
      %p221 = scmp.eq.s32.totalorder %s27, 15
      %p222 = por %p220, %p221
      %p224 = scmp.ne.s32.totalorder %s207, %s223
      %p225 = scmp.eq.s32.totalorder %s27, 0
      %p226 = por %p224, %p225
      %s227 = smul.u32 %s29, 2
      %s228 = sadd.s32 %s227, 2
      %s229 = smul.u32 %s36, 2
      %s230 = sadd.s32 %s229, 2
      %s231 = ssub.s32 %s28, %s40
      %s232 = ssub.s32 %s228, %s230
      %s233 = sor.u32 %s231, %s232
      %p234 = scmp.eq.s32.totalorder %s233, 0
      %s236 = sadd.s32 %s235, 1
      %s237 = scalar_select %p234, %s235, %s236
      %p240 = pneg %p234
      %p241 = scmp.eq.s32.totalorder %s21, 15
      %p242 = por %p240, %p241
      %p243 = scmp.ne.s32.totalorder %s235, %s238
      %p244 = scmp.eq.s32.totalorder %s21, 0
      %p245 = por %p243, %p244
      %p246 = scmp.ne.s32.totalorder %s235, %s238
      %p247 = scmp.eq.s32.totalorder %s26, 15
      %p248 = por %p246, %p247
      %p249 = scmp.ne.s32.totalorder %s238, %s239
      %p250 = scmp.eq.s32.totalorder %s26, 0
      %p251 = por %p249, %p250
      %p252 = scmp.ne.s32.totalorder %s238, %s239
      %p253 = scmp.eq.s32.totalorder %s27, 15
      %p254 = por %p252, %p253
      %p256 = scmp.ne.s32.totalorder %s239, %s255
      %p257 = scmp.eq.s32.totalorder %s27, 0
      %p258 = por %p256, %p257
      %s259 = smul.u32 %s29, 2
      %s260 = sadd.s32 %s259, 2
      %s261 = smul.u32 %s36, 2
      %s262 = sadd.s32 %s261, 2
      %s263 = ssub.s32 %s28, %s40
      %s264 = ssub.s32 %s260, %s262
      %s265 = sor.u32 %s263, %s264
      %p266 = scmp.eq.s32.totalorder %s265, 0
      %s268 = sadd.s32 %s267, 1
      %s269 = scalar_select %p266, %s267, %s268
      %p272 = pneg %p266
      %p273 = scmp.eq.s32.totalorder %s21, 15
      %p274 = por %p272, %p273
      %p275 = scmp.ne.s32.totalorder %s267, %s270
      %p276 = scmp.eq.s32.totalorder %s21, 0
      %p277 = por %p275, %p276
      %p278 = scmp.ne.s32.totalorder %s267, %s270
      %p279 = scmp.eq.s32.totalorder %s26, 15
      %p280 = por %p278, %p279
      %p281 = scmp.ne.s32.totalorder %s270, %s271
      %p282 = scmp.eq.s32.totalorder %s26, 0
      %p283 = por %p281, %p282
      %p284 = scmp.ne.s32.totalorder %s270, %s271
      %p285 = scmp.eq.s32.totalorder %s27, 15
      %p286 = por %p284, %p285
      %p288 = scmp.ne.s32.totalorder %s271, %s287
      %p289 = scmp.eq.s32.totalorder %s27, 0
      %p290 = por %p288, %p289
      %s291 = smul.u32 %s29, 2
      %s292 = sadd.s32 %s291, 2
      %s293 = smul.u32 %s36, 2
      %s294 = sadd.s32 %s293, 2
      %s295 = ssub.s32 %s28, %s40
      %s296 = ssub.s32 %s292, %s294
      %s297 = sor.u32 %s295, %s296
      %p298 = scmp.eq.s32.totalorder %s297, 0
      %s300 = sadd.s32 %s299, 1
      %s301 = scalar_select %p298, %s299, %s300
      %p304 = pneg %p298
      %p305 = scmp.eq.s32.totalorder %s21, 15
      %p306 = por %p304, %p305
      %p307 = scmp.ne.s32.totalorder %s299, %s302
      %p308 = scmp.eq.s32.totalorder %s21, 0
      %p309 = por %p307, %p308
      %p310 = scmp.ne.s32.totalorder %s299, %s302
      %p311 = scmp.eq.s32.totalorder %s26, 15
      %p312 = por %p310, %p311
      %p313 = scmp.ne.s32.totalorder %s302, %s303
      %p314 = scmp.eq.s32.totalorder %s26, 0
      %p315 = por %p313, %p314
      %p316 = scmp.ne.s32.totalorder %s302, %s303
      %p317 = scmp.eq.s32.totalorder %s27, 15
      %p318 = por %p316, %p317
      %p320 = scmp.ne.s32.totalorder %s303, %s319
      %p321 = scmp.eq.s32.totalorder %s27, 0
      %p322 = por %p320, %p321
      %s324 = sadd.s32 %s323, 1
      %p327 = scmp.eq.s32.totalorder %s21, 15
      %p328 = scmp.ne.s32.totalorder %s323, %s325
      %p329 = scmp.eq.s32.totalorder %s21, 0
      %p330 = por %p328, %p329
      %p331 = scmp.ne.s32.totalorder %s323, %s325
      %p332 = scmp.eq.s32.totalorder %s26, 15
      %p333 = por %p331, %p332
      %p334 = scmp.ne.s32.totalorder %s325, %s326
      %p335 = scmp.eq.s32.totalorder %s26, 0
      %p336 = por %p334, %p335
      %p337 = scmp.ne.s32.totalorder %s325, %s326
      %p338 = scmp.eq.s32.totalorder %s27, 15
      %p339 = por %p337, %p338
      %p341 = scmp.ne.s32.totalorder %s326, %s340
      %p342 = scmp.eq.s32.totalorder %s27, 0
      %p343 = por %p341, %p342
      %s345 = sadd.s32 %s344, 1
      %p348 = scmp.eq.s32.totalorder %s21, 15
      %p349 = scmp.ne.s32.totalorder %s344, %s346
      %p350 = scmp.eq.s32.totalorder %s21, 0
      %p351 = por %p349, %p350
      %p352 = scmp.ne.s32.totalorder %s344, %s346
      %p353 = scmp.eq.s32.totalorder %s26, 15
      %p354 = por %p352, %p353
      %p355 = scmp.ne.s32.totalorder %s346, %s347
      %p356 = scmp.eq.s32.totalorder %s26, 0
      %p357 = por %p355, %p356
      %p358 = scmp.ne.s32.totalorder %s346, %s347
      %p359 = scmp.eq.s32.totalorder %s27, 15
      %p360 = por %p358, %p359
      %p362 = scmp.ne.s32.totalorder %s347, %s361
      %p363 = scmp.eq.s32.totalorder %s27, 0
      %p364 = por %p362, %p363
      %s366 = sadd.s32 %s365, 1
      %p369 = scmp.eq.s32.totalorder %s21, 15
      %p370 = scmp.ne.s32.totalorder %s365, %s367
      %p371 = scmp.eq.s32.totalorder %s21, 0
      %p372 = por %p370, %p371
      %p373 = scmp.ne.s32.totalorder %s365, %s367
      %p374 = scmp.eq.s32.totalorder %s26, 15
      %p375 = por %p373, %p374
      %p376 = scmp.ne.s32.totalorder %s367, %s368
      %p377 = scmp.eq.s32.totalorder %s26, 0
      %p378 = por %p376, %p377
      %p379 = scmp.ne.s32.totalorder %s367, %s368
      %p380 = scmp.eq.s32.totalorder %s27, 15
      %p381 = por %p379, %p380
      %p383 = scmp.ne.s32.totalorder %s368, %s382
      %p384 = scmp.eq.s32.totalorder %s27, 0
      %p385 = por %p383, %p384
      %s386 = ssub.s32 %s28, %s40
      %s387 = ssub.s32 %s29, %s36
      %s388 = sor.u32 %s386, %s387
      %p389 = scmp.eq.s32.totalorder %s388, 0
      %s391 = sadd.s32 %s390, 1
      %s392 = scalar_select %p389, %s390, %s391
      %p395 = pneg %p389
      %p396 = scmp.eq.s32.totalorder %s21, 15
      %p397 = por %p395, %p396
      %p398 = scmp.ne.s32.totalorder %s390, %s393
      %p399 = scmp.eq.s32.totalorder %s21, 0
      %p400 = por %p398, %p399
      %p401 = scmp.ne.s32.totalorder %s390, %s393
      %p402 = scmp.eq.s32.totalorder %s26, 15
      %p403 = por %p401, %p402
      %p404 = scmp.ne.s32.totalorder %s393, %s394
      %p405 = scmp.eq.s32.totalorder %s26, 0
      %p406 = por %p404, %p405
      %p407 = scmp.ne.s32.totalorder %s393, %s394
      %p408 = scmp.eq.s32.totalorder %s27, 15
      %p409 = por %p407, %p408
      %p411 = scmp.ne.s32.totalorder %s394, %s410
      %p412 = scmp.eq.s32.totalorder %s27, 0
      %p413 = por %p411, %p412
      %p414 = scmp.le.s32.totalorder 1, %s21
      %p415 = scmp.lt.s32.totalorder %s21, 17
      %p416 = pnand %p414, %p415
      %p417 = pneg %p416
      // Predicated region
      $region9: #{tpu_custom_call.1} parent=5 // pred_check
        _
      $region10: #{tpu_custom_call.1} parent=5 // pred_check_branch
        %419 = sbr.rel (%p416) target = $region12
      $region11: #{tpu_custom_call.1} parent=5 // pred_region
        %s420 = ssub.s32 %s21, 1
        // Predicated region
        $region13: #{tpu_custom_call.1} parent=11 // pred_check
          %p421 = pneg %p336
        $region14: #{tpu_custom_call.1} parent=11 // pred_check_branch
          %423 = sbr.rel (%p421) target = $region16
        $region15: #{tpu_custom_call.1} parent=11 // pred_region
          _
        $region16: #{tpu_custom_call.1} parent=11 // pred_fallthru
          _
        // Predicated region
        $region17: #{tpu_custom_call.1} parent=11 // pred_check
          %p424 = pneg %p357
        $region18: #{tpu_custom_call.1} parent=11 // pred_check_branch
          %426 = sbr.rel (%p424) target = $region20
        $region19: #{tpu_custom_call.1} parent=11 // pred_region
          _
        $region20: #{tpu_custom_call.1} parent=11 // pred_fallthru
          _
        // Predicated region
        $region21: #{tpu_custom_call.1} parent=11 // pred_check
          %p427 = pneg %p378
        $region22: #{tpu_custom_call.1} parent=11 // pred_check_branch
          %429 = sbr.rel (%p427) target = $region24
        $region23: #{tpu_custom_call.1} parent=11 // pred_region
          _
        $region24: #{tpu_custom_call.1} parent=11 // pred_fallthru
          _
      $region12: #{tpu_custom_call.1} parent=5 // pred_fallthru
        _
      %p430 = scmp.lt.s32.totalorder %s21, 16
      // Predicated region
      $region25: #{tpu_custom_call.1} parent=5 // pred_check
        %p431 = pneg %p430
      $region26: #{tpu_custom_call.1} parent=5 // pred_check_branch
        %433 = sbr.rel (%p431) target = $region28
      $region27: #{tpu_custom_call.1} parent=5 // pred_region
        // Predicated region
        $region29: #{tpu_custom_call.1} parent=27 // pred_check
          %p434 = pneg %p57
        $region30: #{tpu_custom_call.1} parent=27 // pred_check_branch
          %436 = sbr.rel (%p434) target = $region32
        $region31: #{tpu_custom_call.1} parent=27 // pred_region
          %s437 = smul.u32 %s29, 2
          %p438 = scmp.lt.s32.totalorder %s28, 1
          %s439 = scalar_select %p438, %s28, 1
          %p440 = scmp.lt.s32.totalorder %s437, 17
          %s441 = scalar_select %p440, %s437, 17
          %s442 = smul.addr %s439, 18
          %s443 = sadd.s32 %s441, %s442
          %s444 = smul.addr %s443, 4
          %s445 = scalar_lea.vmem %s0, %s444
          %s446 = smul.u32 %s29, 2
        $region32: #{tpu_custom_call.1} parent=27 // pred_fallthru
          _
        // Predicated region
        $region33: #{tpu_custom_call.1} parent=27 // pred_check
          %p447 = pneg %p87
        $region34: #{tpu_custom_call.1} parent=27 // pred_check_branch
          %449 = sbr.rel (%p447) target = $region36
        $region35: #{tpu_custom_call.1} parent=27 // pred_region
          %s450 = smul.u32 %s29, 2
          %p451 = scmp.lt.s32.totalorder %s28, 1
          %s452 = scalar_select %p451, %s28, 1
          %p453 = scmp.lt.s32.totalorder %s450, 17
          %s454 = scalar_select %p453, %s450, 17
          %s455 = smul.addr %s452, 18
          %s456 = sadd.s32 %s454, %s455
          %s457 = smul.addr %s456, 4
          %s458 = scalar_lea.vmem %s1, %s457
          %s459 = smul.u32 %s29, 2
        $region36: #{tpu_custom_call.1} parent=27 // pred_fallthru
          _
        // Predicated region
        $region37: #{tpu_custom_call.1} parent=27 // pred_check
          %p460 = pneg %p117
        $region38: #{tpu_custom_call.1} parent=27 // pred_check_branch
          %462 = sbr.rel (%p460) target = $region40
        $region39: #{tpu_custom_call.1} parent=27 // pred_region
          %s463 = smul.u32 %s29, 2
          %p464 = scmp.lt.s32.totalorder %s28, 1
          %s465 = scalar_select %p464, %s28, 1
          %p466 = scmp.lt.s32.totalorder %s463, 17
          %s467 = scalar_select %p466, %s463, 17
          %s468 = smul.addr %s465, 18
          %s469 = sadd.s32 %s467, %s468
          %s470 = smul.addr %s469, 4
          %s471 = scalar_lea.vmem %s2, %s470
          %s472 = smul.u32 %s29, 2
        $region40: #{tpu_custom_call.1} parent=27 // pred_fallthru
          _
        // Predicated region
        $region41: #{tpu_custom_call.1} parent=27 // pred_check
          %p473 = pneg %p149
        $region42: #{tpu_custom_call.1} parent=27 // pred_check_branch
          %475 = sbr.rel (%p473) target = $region44
        $region43: #{tpu_custom_call.1} parent=27 // pred_region
          %s476 = smul.u32 %s29, 2
          %s477 = sadd.s32 %s476, 1
          %p478 = scmp.lt.s32.totalorder %s28, 1
          %s479 = scalar_select %p478, %s28, 1
          %p480 = scmp.lt.s32.totalorder %s477, 17
          %s481 = scalar_select %p480, %s477, 17
          %s482 = smul.addr %s479, 18
          %s483 = sadd.s32 %s481, %s482
          %s484 = smul.addr %s483, 4
          %s485 = scalar_lea.vmem %s3, %s484
          %s486 = smul.u32 %s29, 2
          %s487 = sadd.s32 %s486, 1
        $region44: #{tpu_custom_call.1} parent=27 // pred_fallthru
          _
        // Predicated region
        $region45: #{tpu_custom_call.1} parent=27 // pred_check
          %p488 = pneg %p181
        $region46: #{tpu_custom_call.1} parent=27 // pred_check_branch
          %490 = sbr.rel (%p488) target = $region48
        $region47: #{tpu_custom_call.1} parent=27 // pred_region
          %s491 = smul.u32 %s29, 2
          %s492 = sadd.s32 %s491, 1
          %p493 = scmp.lt.s32.totalorder %s28, 1
          %s494 = scalar_select %p493, %s28, 1
          %p495 = scmp.lt.s32.totalorder %s492, 17
          %s496 = scalar_select %p495, %s492, 17
          %s497 = smul.addr %s494, 18
          %s498 = sadd.s32 %s496, %s497
          %s499 = smul.addr %s498, 4
          %s500 = scalar_lea.vmem %s4, %s499
          %s501 = smul.u32 %s29, 2
          %s502 = sadd.s32 %s501, 1
        $region48: #{tpu_custom_call.1} parent=27 // pred_fallthru
          _
        // Predicated region
        $region49: #{tpu_custom_call.1} parent=27 // pred_check
          %p503 = pneg %p213
        $region50: #{tpu_custom_call.1} parent=27 // pred_check_branch
          %505 = sbr.rel (%p503) target = $region52
        $region51: #{tpu_custom_call.1} parent=27 // pred_region
          %s506 = smul.u32 %s29, 2
          %s507 = sadd.s32 %s506, 1
          %p508 = scmp.lt.s32.totalorder %s28, 1
          %s509 = scalar_select %p508, %s28, 1
          %p510 = scmp.lt.s32.totalorder %s507, 17
          %s511 = scalar_select %p510, %s507, 17
          %s512 = smul.addr %s509, 18
          %s513 = sadd.s32 %s511, %s512
          %s514 = smul.addr %s513, 4
          %s515 = scalar_lea.vmem %s5, %s514
          %s516 = smul.u32 %s29, 2
          %s517 = sadd.s32 %s516, 1
        $region52: #{tpu_custom_call.1} parent=27 // pred_fallthru
          _
        // Predicated region
        $region53: #{tpu_custom_call.1} parent=27 // pred_check
          %p518 = pneg %p245
        $region54: #{tpu_custom_call.1} parent=27 // pred_check_branch
          %520 = sbr.rel (%p518) target = $region56
        $region55: #{tpu_custom_call.1} parent=27 // pred_region
          %s521 = smul.u32 %s29, 2
          %s522 = sadd.s32 %s521, 2
          %p523 = scmp.lt.s32.totalorder %s28, 1
          %s524 = scalar_select %p523, %s28, 1
          %p525 = scmp.lt.s32.totalorder %s522, 17
          %s526 = scalar_select %p525, %s522, 17
          %s527 = smul.addr %s524, 18
          %s528 = sadd.s32 %s526, %s527
          %s529 = smul.addr %s528, 4
          %s530 = scalar_lea.vmem %s6, %s529
          %s531 = smul.u32 %s29, 2
          %s532 = sadd.s32 %s531, 2
        $region56: #{tpu_custom_call.1} parent=27 // pred_fallthru
          _
        // Predicated region
        $region57: #{tpu_custom_call.1} parent=27 // pred_check
          %p533 = pneg %p277
        $region58: #{tpu_custom_call.1} parent=27 // pred_check_branch
          %535 = sbr.rel (%p533) target = $region60
        $region59: #{tpu_custom_call.1} parent=27 // pred_region
          %s536 = smul.u32 %s29, 2
          %s537 = sadd.s32 %s536, 2
          %p538 = scmp.lt.s32.totalorder %s28, 1
          %s539 = scalar_select %p538, %s28, 1
          %p540 = scmp.lt.s32.totalorder %s537, 17
          %s541 = scalar_select %p540, %s537, 17
          %s542 = smul.addr %s539, 18
          %s543 = sadd.s32 %s541, %s542
          %s544 = smul.addr %s543, 4
          %s545 = scalar_lea.vmem %s7, %s544
          %s546 = smul.u32 %s29, 2
          %s547 = sadd.s32 %s546, 2
        $region60: #{tpu_custom_call.1} parent=27 // pred_fallthru
          _
        // Predicated region
        $region61: #{tpu_custom_call.1} parent=27 // pred_check
          %p548 = pneg %p309
        $region62: #{tpu_custom_call.1} parent=27 // pred_check_branch
          %550 = sbr.rel (%p548) target = $region64
        $region63: #{tpu_custom_call.1} parent=27 // pred_region
          %s551 = smul.u32 %s29, 2
          %s552 = sadd.s32 %s551, 2
          %p553 = scmp.lt.s32.totalorder %s28, 1
          %s554 = scalar_select %p553, %s28, 1
          %p555 = scmp.lt.s32.totalorder %s552, 17
          %s556 = scalar_select %p555, %s552, 17
          %s557 = smul.addr %s554, 18
          %s558 = sadd.s32 %s556, %s557
          %s559 = smul.addr %s558, 4
          %s560 = scalar_lea.vmem %s8, %s559
          %s561 = smul.u32 %s29, 2
          %s562 = sadd.s32 %s561, 2
        $region64: #{tpu_custom_call.1} parent=27 // pred_fallthru
          _
      $region28: #{tpu_custom_call.1} parent=5 // pred_fallthru
        _
      %p563 = scmp.le.s32.totalorder 1, %s21
      %p564 = scmp.lt.s32.totalorder %s21, 17
      %p565 = pnand %p563, %p564
      %p566 = pneg %p565
      // Predicated region
      $region65: #{tpu_custom_call.1} parent=5 // pred_check
        _
      $region66: #{tpu_custom_call.1} parent=5 // pred_check_branch
        %568 = sbr.rel (%p565) target = $region68
      $region67: #{tpu_custom_call.1} parent=5 // pred_region
        %s569 = ssub.s32 %s21, 1
        %s570 = smul.u32 %s31, 2
        %p571 = scmp.lt.s32.totalorder %s30, 1
        %s572 = scalar_select %p571, %s30, 1
        %p573 = scmp.lt.s32.totalorder %s570, 17
        %s574 = scalar_select %p573, %s570, 17
        %s575 = smul.addr %s572, 18
        %s576 = sadd.s32 %s574, %s575
        %s577 = smul.addr %s576, 4
        %s578 = scalar_lea.vmem %s0, %s577
        %p579 = pneg %p63
        %p580 = pneg %p60
        %s581 = smul.u32 %s31, 2
        %p582 = scmp.lt.s32.totalorder %s30, 1
        %s583 = scalar_select %p582, %s30, 1
        %p584 = scmp.lt.s32.totalorder %s581, 17
        %s585 = scalar_select %p584, %s581, 17
        %s586 = smul.addr %s583, 18
        %s587 = sadd.s32 %s585, %s586
        %s588 = smul.addr %s587, 4
        %s589 = scalar_lea.vmem %s1, %s588
        %p590 = pneg %p93
        %p591 = pneg %p90
        %s592 = smul.u32 %s31, 2
        %p593 = scmp.lt.s32.totalorder %s30, 1
        %s594 = scalar_select %p593, %s30, 1
        %p595 = scmp.lt.s32.totalorder %s592, 17
        %s596 = scalar_select %p595, %s592, 17
        %s597 = smul.addr %s594, 18
        %s598 = sadd.s32 %s596, %s597
        %s599 = smul.addr %s598, 4
        %s600 = scalar_lea.vmem %s2, %s599
        %p601 = pneg %p123
        %p602 = pneg %p120
        %s603 = smul.u32 %s31, 2
        %s604 = sadd.s32 %s603, 1
        %p605 = scmp.lt.s32.totalorder %s30, 1
        %s606 = scalar_select %p605, %s30, 1
        %p607 = scmp.lt.s32.totalorder %s604, 17
        %s608 = scalar_select %p607, %s604, 17
        %s609 = smul.addr %s606, 18
        %s610 = sadd.s32 %s608, %s609
        %s611 = smul.addr %s610, 4
        %s612 = scalar_lea.vmem %s3, %s611
        %p613 = pneg %p155
        %p614 = pneg %p152
        %s615 = smul.u32 %s31, 2
        %s616 = sadd.s32 %s615, 1
        %p617 = scmp.lt.s32.totalorder %s30, 1
        %s618 = scalar_select %p617, %s30, 1
        %p619 = scmp.lt.s32.totalorder %s616, 17
        %s620 = scalar_select %p619, %s616, 17
        %s621 = smul.addr %s618, 18
        %s622 = sadd.s32 %s620, %s621
        %s623 = smul.addr %s622, 4
        %s624 = scalar_lea.vmem %s4, %s623
        %p625 = pneg %p187
        %p626 = pneg %p184
        %s627 = smul.u32 %s31, 2
        %s628 = sadd.s32 %s627, 1
        %p629 = scmp.lt.s32.totalorder %s30, 1
        %s630 = scalar_select %p629, %s30, 1
        %p631 = scmp.lt.s32.totalorder %s628, 17
        %s632 = scalar_select %p631, %s628, 17
        %s633 = smul.addr %s630, 18
        %s634 = sadd.s32 %s632, %s633
        %s635 = smul.addr %s634, 4
        %s636 = scalar_lea.vmem %s5, %s635
        %p637 = pneg %p219
        %p638 = pneg %p216
        %s639 = smul.u32 %s31, 2
        %s640 = sadd.s32 %s639, 2
        %p641 = scmp.lt.s32.totalorder %s30, 1
        %s642 = scalar_select %p641, %s30, 1
        %p643 = scmp.lt.s32.totalorder %s640, 17
        %s644 = scalar_select %p643, %s640, 17
        %s645 = smul.addr %s642, 18
        %s646 = sadd.s32 %s644, %s645
        %s647 = smul.addr %s646, 4
        %s648 = scalar_lea.vmem %s6, %s647
        %p649 = pneg %p251
        %p650 = pneg %p248
        %s651 = smul.u32 %s31, 2
        %s652 = sadd.s32 %s651, 2
        %p653 = scmp.lt.s32.totalorder %s30, 1
        %s654 = scalar_select %p653, %s30, 1
        %p655 = scmp.lt.s32.totalorder %s652, 17
        %s656 = scalar_select %p655, %s652, 17
        %s657 = smul.addr %s654, 18
        %s658 = sadd.s32 %s656, %s657
        %s659 = smul.addr %s658, 4
        %s660 = scalar_lea.vmem %s7, %s659
        %p661 = pneg %p283
        %p662 = pneg %p280
        %s663 = smul.u32 %s31, 2
        %s664 = sadd.s32 %s663, 2
        %p665 = scmp.lt.s32.totalorder %s30, 1
        %s666 = scalar_select %p665, %s30, 1
        %p667 = scmp.lt.s32.totalorder %s664, 17
        %s668 = scalar_select %p667, %s664, 17
        %s669 = smul.addr %s666, 18
        %s670 = sadd.s32 %s668, %s669
        %s671 = smul.addr %s670, 4
        %s672 = scalar_lea.vmem %s8, %s671
        %p673 = pneg %p315
        %p674 = pneg %p312
        %p675 = pneg %p336
        %p676 = pneg %p333
        %p677 = pneg %p357
        %p678 = pneg %p354
        %p679 = pneg %p378
        %p680 = pneg %p375
        %p681 = pneg %p406
        %p682 = pneg %p403
        %s683 = sand.u32 %s393, 1
        %s684 = scalar_lea.sflag [#allocation3], %s683
        %s685 = sand.u32 %s393, 1
        %s686 = smul.addr %s685, 4
        %s687 = scalar_lea.vmem [#allocation2], %s686
        %s688 = smul.u32 %s31, 2
        %p689 = scmp.lt.s32.totalorder %s30, 1
        %s690 = scalar_select %p689, %s30, 1
        %p691 = scmp.lt.s32.totalorder %s688, 17
        %s692 = scalar_select %p691, %s688, 17
        %s693 = smul.addr %s690, 18
        %s694 = sadd.s32 %s692, %s693
        %s695 = smul.addr %s694, 4
        %s696 = scalar_lea.vmem %s0, %s695
        %s697 = smul.u32 %s31, 2
        %s698 = smul.u32 %s31, 2
        %p699 = scmp.lt.s32.totalorder %s30, 1
        %s700 = scalar_select %p699, %s30, 1
        %p701 = scmp.lt.s32.totalorder %s698, 17
        %s702 = scalar_select %p701, %s698, 17
        %s703 = smul.addr %s700, 18
        %s704 = sadd.s32 %s702, %s703
        %s705 = smul.addr %s704, 4
        %s706 = scalar_lea.vmem %s1, %s705
        %s707 = smul.u32 %s31, 2
        %s708 = smul.u32 %s31, 2
        %p709 = scmp.lt.s32.totalorder %s30, 1
        %s710 = scalar_select %p709, %s30, 1
        %p711 = scmp.lt.s32.totalorder %s708, 17
        %s712 = scalar_select %p711, %s708, 17
        %s713 = smul.addr %s710, 18
        %s714 = sadd.s32 %s712, %s713
        %s715 = smul.addr %s714, 4
        %s716 = scalar_lea.vmem %s2, %s715
        %s717 = smul.u32 %s31, 2
        %s718 = smul.u32 %s31, 2
        %s719 = sadd.s32 %s718, 1
        %p720 = scmp.lt.s32.totalorder %s30, 1
        %s721 = scalar_select %p720, %s30, 1
        %p722 = scmp.lt.s32.totalorder %s719, 17
        %s723 = scalar_select %p722, %s719, 17
        %s724 = smul.addr %s721, 18
        %s725 = sadd.s32 %s723, %s724
        %s726 = smul.addr %s725, 4
        %s727 = scalar_lea.vmem %s3, %s726
        %s728 = smul.u32 %s31, 2
        %s729 = sadd.s32 %s728, 1
        %s730 = smul.u32 %s31, 2
        %s731 = sadd.s32 %s730, 1
        %p732 = scmp.lt.s32.totalorder %s30, 1
        %s733 = scalar_select %p732, %s30, 1
        %p734 = scmp.lt.s32.totalorder %s731, 17
        %s735 = scalar_select %p734, %s731, 17
        %s736 = smul.addr %s733, 18
        %s737 = sadd.s32 %s735, %s736
        %s738 = smul.addr %s737, 4
        %s739 = scalar_lea.vmem %s4, %s738
        %s740 = smul.u32 %s31, 2
        %s741 = sadd.s32 %s740, 1
        %s742 = smul.u32 %s31, 2
        %s743 = sadd.s32 %s742, 1
        %p744 = scmp.lt.s32.totalorder %s30, 1
        %s745 = scalar_select %p744, %s30, 1
        %p746 = scmp.lt.s32.totalorder %s743, 17
        %s747 = scalar_select %p746, %s743, 17
        %s748 = smul.addr %s745, 18
        %s749 = sadd.s32 %s747, %s748
        %s750 = smul.addr %s749, 4
        %s751 = scalar_lea.vmem %s5, %s750
        %s752 = smul.u32 %s31, 2
        %s753 = sadd.s32 %s752, 1
        %s754 = smul.u32 %s31, 2
        %s755 = sadd.s32 %s754, 2
        %p756 = scmp.lt.s32.totalorder %s30, 1
        %s757 = scalar_select %p756, %s30, 1
        %p758 = scmp.lt.s32.totalorder %s755, 17
        %s759 = scalar_select %p758, %s755, 17
        %s760 = smul.addr %s757, 18
        %s761 = sadd.s32 %s759, %s760
        %s762 = smul.addr %s761, 4
        %s763 = scalar_lea.vmem %s6, %s762
        %s764 = smul.u32 %s31, 2
        %s765 = sadd.s32 %s764, 2
        %s766 = smul.u32 %s31, 2
        %s767 = sadd.s32 %s766, 2
        %p768 = scmp.lt.s32.totalorder %s30, 1
        %s769 = scalar_select %p768, %s30, 1
        %p770 = scmp.lt.s32.totalorder %s767, 17
        %s771 = scalar_select %p770, %s767, 17
        %s772 = smul.addr %s769, 18
        %s773 = sadd.s32 %s771, %s772
        %s774 = smul.addr %s773, 4
        %s775 = scalar_lea.vmem %s7, %s774
        %s776 = smul.u32 %s31, 2
        %s777 = sadd.s32 %s776, 2
        %s778 = smul.u32 %s31, 2
        %s779 = sadd.s32 %s778, 2
        %p780 = scmp.lt.s32.totalorder %s30, 1
        %s781 = scalar_select %p780, %s30, 1
        %p782 = scmp.lt.s32.totalorder %s779, 17
        %s783 = scalar_select %p782, %s779, 17
        %s784 = smul.addr %s781, 18
        %s785 = sadd.s32 %s783, %s784
        %s786 = smul.addr %s785, 4
        %s787 = scalar_lea.vmem %s8, %s786
        %s788 = smul.u32 %s31, 2
        %s789 = sadd.s32 %s788, 2
        %v791 = vld [vmem:[%s696] sm:$0xf]
        %v792 = vld [vmem:[%s9] sm:$0xf]
        %v793 = vld [vmem:[%s9 + $0x4] sm:$0xf]
        %v794 = vld [vmem:[%s706] sm:$0xf]
        %s795 = scalar_lea.vmem %s9, 8
        %v796 = vld [vmem:[%s795] sm:$0xf]
        %v797 = vld [vmem:[%s795 + $0x4] sm:$0xf]
        %v800 = vunpack.c.l.b16 %v796
        %v801 = vunpack.c.l.b16 %v797
        %v802 = vpack.c.b16 %v801, %v800
        %vm804 = vcmask 130048
        %v806 = vsel %vm804, %v794, 0
        %808 = vmatprep.subr.bf16.mxu0 0
        %809 = vmatpush1.bf16.msra.mxu0 %v802
        %810 = vmatprep.subr.bf16.mxu0 0
        %811 = vmatpush1.bf16.msra.mxu0 0
        %812 = vmatprep.subr.bf16.mxu0 0
        %813 = vmatpush1.bf16.msra.mxu0 0
        %814 = vmatprep.subr.bf16.mxu0 0
        %815 = vmatpush1.bf16.msra.mxu0 0
        %816 = vmatprep.subr.bf16.mxu0 0
        %817 = vmatpush1.bf16.msra.mxu0 0
        %818 = vmatprep.subr.bf16.mxu0 0
        %819 = vmatpush1.bf16.msra.mxu0 0
        %820 = vmatprep.subr.bf16.mxu0 0
        %821 = vmatpush1.bf16.msra.mxu0 0
        %822 = vmatprep.subr.bf16.mxu0 0
        %823 = vmatpush1.bf16.msra.mxu0 0
        %824 = vmatprep.subr.bf16.mxu0 0
        %825 = vmatpush1.bf16.msra.mxu0 0
        %826 = vmatprep.subr.bf16.mxu0 0
        %827 = vmatpush1.bf16.msra.mxu0 0
        %828 = vmatprep.subr.bf16.mxu0 0
        %829 = vmatpush1.bf16.msra.mxu0 0
        %830 = vmatprep.subr.bf16.mxu0 0
        %831 = vmatpush1.bf16.msra.mxu0 0
        %832 = vmatprep.subr.bf16.mxu0 0
        %833 = vmatpush1.bf16.msra.mxu0 0
        %834 = vmatprep.subr.bf16.mxu0 0
        %835 = vmatpush1.bf16.msra.mxu0 0
        %836 = vmatprep.subr.bf16.mxu0 0
        %837 = vmatpush1.bf16.msra.mxu0 0
        %838 = vmatprep.subr.bf16.mxu0 0
        %839 = vmatpush1.bf16.msra.mxu0 0
        %840 = vmatprep.mubr.bf16.mxu0 0
        %841 = vmatmul.mubr.bf16.gmra.mrb[0].mxu0 %v806
        %v842 = vpop.f32.mrb[0].mxu0
        %v843 = vadd.f32 0.0, %v842
        %v844 = vpop.f32.mrb[0].mxu0
        %v845 = vpop.f32.mrb[0].mxu0
        %v846 = vpop.f32.mrb[0].mxu0
        %847 = vdwg.mxu0
        %v850 = vunpack.c.l.b16 %v792
        %v851 = vunpack.c.l.b16 %v793
        %v852 = vpack.c.b16 %v851, %v850
        %v855 = vsel %vm804, %v791, 0
        %857 = vmatprep.subr.bf16.mxu0 0
        %858 = vmatpush1.bf16.msra.mxu0 %v852
        %859 = vmatprep.subr.bf16.mxu0 0
        %860 = vmatpush1.bf16.msra.mxu0 0
        %861 = vmatprep.subr.bf16.mxu0 0
        %862 = vmatpush1.bf16.msra.mxu0 0
        %863 = vmatprep.subr.bf16.mxu0 0
        %864 = vmatpush1.bf16.msra.mxu0 0
        %865 = vmatprep.subr.bf16.mxu0 0
        %866 = vmatpush1.bf16.msra.mxu0 0
        %867 = vmatprep.subr.bf16.mxu0 0
        %868 = vmatpush1.bf16.msra.mxu0 0
        %869 = vmatprep.subr.bf16.mxu0 0
        %870 = vmatpush1.bf16.msra.mxu0 0
        %871 = vmatprep.subr.bf16.mxu0 0
        %872 = vmatpush1.bf16.msra.mxu0 0
        %873 = vmatprep.subr.bf16.mxu0 0
        %874 = vmatpush1.bf16.msra.mxu0 0
        %875 = vmatprep.subr.bf16.mxu0 0
        %876 = vmatpush1.bf16.msra.mxu0 0
        %877 = vmatprep.subr.bf16.mxu0 0
        %878 = vmatpush1.bf16.msra.mxu0 0
        %879 = vmatprep.subr.bf16.mxu0 0
        %880 = vmatpush1.bf16.msra.mxu0 0
        %881 = vmatprep.subr.bf16.mxu0 0
        %882 = vmatpush1.bf16.msra.mxu0 0
        %883 = vmatprep.subr.bf16.mxu0 0
        %884 = vmatpush1.bf16.msra.mxu0 0
        %885 = vmatprep.subr.bf16.mxu0 0
        %886 = vmatpush1.bf16.msra.mxu0 0
        %887 = vmatprep.subr.bf16.mxu0 0
        %888 = vmatpush1.bf16.msra.mxu0 0
        %889 = vmatprep.mubr.bf16.mxu0 0
        %890 = vmatmul.mubr.bf16.gmra.mrb[0].mxu0 %v855
        %v891 = vpop.f32.mrb[0].mxu0
        %v892 = vadd.f32 %v843, %v891
        %v893 = vpop.f32.mrb[0].mxu0
        %v894 = vpop.f32.mrb[0].mxu0
        %v895 = vpop.f32.mrb[0].mxu0
        %896 = vdwg.mxu0
        %v897 = vld [vmem:[%s716] sm:$0xf]
        %s898 = scalar_lea.vmem %s9, 16
        %v899 = vld [vmem:[%s898] sm:$0xf]
        %v900 = vld [vmem:[%s898 + $0x4] sm:$0xf]
        %v903 = vunpack.c.l.b16 %v899
        %v904 = vunpack.c.l.b16 %v900
        %v905 = vpack.c.b16 %v904, %v903
        %v908 = vsel %vm804, %v897, 0
        %910 = vmatprep.subr.bf16.mxu0 0
        %911 = vmatpush1.bf16.msra.mxu0 %v905
        %912 = vmatprep.subr.bf16.mxu0 0
        %913 = vmatpush1.bf16.msra.mxu0 0
        %914 = vmatprep.subr.bf16.mxu0 0
        %915 = vmatpush1.bf16.msra.mxu0 0
        %916 = vmatprep.subr.bf16.mxu0 0
        %917 = vmatpush1.bf16.msra.mxu0 0
        %918 = vmatprep.subr.bf16.mxu0 0
        %919 = vmatpush1.bf16.msra.mxu0 0
        %920 = vmatprep.subr.bf16.mxu0 0
        %921 = vmatpush1.bf16.msra.mxu0 0
        %922 = vmatprep.subr.bf16.mxu0 0
        %923 = vmatpush1.bf16.msra.mxu0 0
        %924 = vmatprep.subr.bf16.mxu0 0
        %925 = vmatpush1.bf16.msra.mxu0 0
        %926 = vmatprep.subr.bf16.mxu0 0
        %927 = vmatpush1.bf16.msra.mxu0 0
        %928 = vmatprep.subr.bf16.mxu0 0
        %929 = vmatpush1.bf16.msra.mxu0 0
        %930 = vmatprep.subr.bf16.mxu0 0
        %931 = vmatpush1.bf16.msra.mxu0 0
        %932 = vmatprep.subr.bf16.mxu0 0
        %933 = vmatpush1.bf16.msra.mxu0 0
        %934 = vmatprep.subr.bf16.mxu0 0
        %935 = vmatpush1.bf16.msra.mxu0 0
        %936 = vmatprep.subr.bf16.mxu0 0
        %937 = vmatpush1.bf16.msra.mxu0 0
        %938 = vmatprep.subr.bf16.mxu0 0
        %939 = vmatpush1.bf16.msra.mxu0 0
        %940 = vmatprep.subr.bf16.mxu0 0
        %941 = vmatpush1.bf16.msra.mxu0 0
        %942 = vmatprep.mubr.bf16.mxu0 0
        %943 = vmatmul.mubr.bf16.gmra.mrb[0].mxu0 %v908
        %v944 = vpop.f32.mrb[0].mxu0
        %v945 = vadd.f32 0.0, %v944
        %v946 = vpop.f32.mrb[0].mxu0
        %v947 = vpop.f32.mrb[0].mxu0
        %v948 = vpop.f32.mrb[0].mxu0
        %949 = vdwg.mxu0
        %v950 = vadd.f32 %v892, %v945
        %v951 = vld [vmem:[%s727] sm:$0xf]
        %s952 = scalar_lea.vmem %s9, 24
        %v953 = vld [vmem:[%s952] sm:$0xf]
        %v954 = vld [vmem:[%s952 + $0x4] sm:$0xf]
        %v957 = vunpack.c.l.b16 %v953
        %v958 = vunpack.c.l.b16 %v954
        %v959 = vpack.c.b16 %v958, %v957
        %v962 = vsel %vm804, %v951, 0
        %964 = vmatprep.subr.bf16.mxu0 0
        %965 = vmatpush1.bf16.msra.mxu0 %v959
        %966 = vmatprep.subr.bf16.mxu0 0
        %967 = vmatpush1.bf16.msra.mxu0 0
        %968 = vmatprep.subr.bf16.mxu0 0
        %969 = vmatpush1.bf16.msra.mxu0 0
        %970 = vmatprep.subr.bf16.mxu0 0
        %971 = vmatpush1.bf16.msra.mxu0 0
        %972 = vmatprep.subr.bf16.mxu0 0
        %973 = vmatpush1.bf16.msra.mxu0 0
        %974 = vmatprep.subr.bf16.mxu0 0
        %975 = vmatpush1.bf16.msra.mxu0 0
        %976 = vmatprep.subr.bf16.mxu0 0
        %977 = vmatpush1.bf16.msra.mxu0 0
        %978 = vmatprep.subr.bf16.mxu0 0
        %979 = vmatpush1.bf16.msra.mxu0 0
        %980 = vmatprep.subr.bf16.mxu0 0
        %981 = vmatpush1.bf16.msra.mxu0 0
        %982 = vmatprep.subr.bf16.mxu0 0
        %983 = vmatpush1.bf16.msra.mxu0 0
        %984 = vmatprep.subr.bf16.mxu0 0
        %985 = vmatpush1.bf16.msra.mxu0 0
        %986 = vmatprep.subr.bf16.mxu0 0
        %987 = vmatpush1.bf16.msra.mxu0 0
        %988 = vmatprep.subr.bf16.mxu0 0
        %989 = vmatpush1.bf16.msra.mxu0 0
        %990 = vmatprep.subr.bf16.mxu0 0
        %991 = vmatpush1.bf16.msra.mxu0 0
        %992 = vmatprep.subr.bf16.mxu0 0
        %993 = vmatpush1.bf16.msra.mxu0 0
        %994 = vmatprep.subr.bf16.mxu0 0
        %995 = vmatpush1.bf16.msra.mxu0 0
        %996 = vmatprep.mubr.bf16.mxu0 0
        %997 = vmatmul.mubr.bf16.gmra.mrb[0].mxu0 %v962
        %v998 = vpop.f32.mrb[0].mxu0
        %v999 = vadd.f32 0.0, %v998
        %v1000 = vpop.f32.mrb[0].mxu0
        %v1001 = vpop.f32.mrb[0].mxu0
        %v1002 = vpop.f32.mrb[0].mxu0
        %1003 = vdwg.mxu0
        %v1004 = vadd.f32 %v950, %v999
        %v1005 = vld [vmem:[%s739] sm:$0xf]
        %s1006 = scalar_lea.vmem %s9, 32
        %v1007 = vld [vmem:[%s1006] sm:$0xf]
        %v1008 = vld [vmem:[%s1006 + $0x4] sm:$0xf]
        %v1011 = vunpack.c.l.b16 %v1007
        %v1012 = vunpack.c.l.b16 %v1008
        %v1013 = vpack.c.b16 %v1012, %v1011
        %v1016 = vsel %vm804, %v1005, 0
        %1018 = vmatprep.subr.bf16.mxu0 0
        %1019 = vmatpush1.bf16.msra.mxu0 %v1013
        %1020 = vmatprep.subr.bf16.mxu0 0
        %1021 = vmatpush1.bf16.msra.mxu0 0
        %1022 = vmatprep.subr.bf16.mxu0 0
        %1023 = vmatpush1.bf16.msra.mxu0 0
        %1024 = vmatprep.subr.bf16.mxu0 0
        %1025 = vmatpush1.bf16.msra.mxu0 0
        %1026 = vmatprep.subr.bf16.mxu0 0
        %1027 = vmatpush1.bf16.msra.mxu0 0
        %1028 = vmatprep.subr.bf16.mxu0 0
        %1029 = vmatpush1.bf16.msra.mxu0 0
        %1030 = vmatprep.subr.bf16.mxu0 0
        %1031 = vmatpush1.bf16.msra.mxu0 0
        %1032 = vmatprep.subr.bf16.mxu0 0
        %1033 = vmatpush1.bf16.msra.mxu0 0
        %1034 = vmatprep.subr.bf16.mxu0 0
        %1035 = vmatpush1.bf16.msra.mxu0 0
        %1036 = vmatprep.subr.bf16.mxu0 0
        %1037 = vmatpush1.bf16.msra.mxu0 0
        %1038 = vmatprep.subr.bf16.mxu0 0
        %1039 = vmatpush1.bf16.msra.mxu0 0
        %1040 = vmatprep.subr.bf16.mxu0 0
        %1041 = vmatpush1.bf16.msra.mxu0 0
        %1042 = vmatprep.subr.bf16.mxu0 0
        %1043 = vmatpush1.bf16.msra.mxu0 0
        %1044 = vmatprep.subr.bf16.mxu0 0
        %1045 = vmatpush1.bf16.msra.mxu0 0
        %1046 = vmatprep.subr.bf16.mxu0 0
        %1047 = vmatpush1.bf16.msra.mxu0 0
        %1048 = vmatprep.subr.bf16.mxu0 0
        %1049 = vmatpush1.bf16.msra.mxu0 0
        %1050 = vmatprep.mubr.bf16.mxu0 0
        %1051 = vmatmul.mubr.bf16.gmra.mrb[0].mxu0 %v1016
        %v1052 = vpop.f32.mrb[0].mxu0
        %v1053 = vadd.f32 0.0, %v1052
        %v1054 = vpop.f32.mrb[0].mxu0
        %v1055 = vpop.f32.mrb[0].mxu0
        %v1056 = vpop.f32.mrb[0].mxu0
        %1057 = vdwg.mxu0
        %v1058 = vadd.f32 %v1004, %v1053
        %v1059 = vld [vmem:[%s751] sm:$0xf]
        %s1060 = scalar_lea.vmem %s9, 40
        %v1061 = vld [vmem:[%s1060] sm:$0xf]
        %v1062 = vld [vmem:[%s1060 + $0x4] sm:$0xf]
        %v1065 = vunpack.c.l.b16 %v1061
        %v1066 = vunpack.c.l.b16 %v1062
        %v1067 = vpack.c.b16 %v1066, %v1065
        %v1070 = vsel %vm804, %v1059, 0
        %1072 = vmatprep.subr.bf16.mxu0 0
        %1073 = vmatpush1.bf16.msra.mxu0 %v1067
        %1074 = vmatprep.subr.bf16.mxu0 0
        %1075 = vmatpush1.bf16.msra.mxu0 0
        %1076 = vmatprep.subr.bf16.mxu0 0
        %1077 = vmatpush1.bf16.msra.mxu0 0
        %1078 = vmatprep.subr.bf16.mxu0 0
        %1079 = vmatpush1.bf16.msra.mxu0 0
        %1080 = vmatprep.subr.bf16.mxu0 0
        %1081 = vmatpush1.bf16.msra.mxu0 0
        %1082 = vmatprep.subr.bf16.mxu0 0
        %1083 = vmatpush1.bf16.msra.mxu0 0
        %1084 = vmatprep.subr.bf16.mxu0 0
        %1085 = vmatpush1.bf16.msra.mxu0 0
        %1086 = vmatprep.subr.bf16.mxu0 0
        %1087 = vmatpush1.bf16.msra.mxu0 0
        %1088 = vmatprep.subr.bf16.mxu0 0
        %1089 = vmatpush1.bf16.msra.mxu0 0
        %1090 = vmatprep.subr.bf16.mxu0 0
        %1091 = vmatpush1.bf16.msra.mxu0 0
        %1092 = vmatprep.subr.bf16.mxu0 0
        %1093 = vmatpush1.bf16.msra.mxu0 0
        %1094 = vmatprep.subr.bf16.mxu0 0
        %1095 = vmatpush1.bf16.msra.mxu0 0
        %1096 = vmatprep.subr.bf16.mxu0 0
        %1097 = vmatpush1.bf16.msra.mxu0 0
        %1098 = vmatprep.subr.bf16.mxu0 0
        %1099 = vmatpush1.bf16.msra.mxu0 0
        %1100 = vmatprep.subr.bf16.mxu0 0
        %1101 = vmatpush1.bf16.msra.mxu0 0
        %1102 = vmatprep.subr.bf16.mxu0 0
        %1103 = vmatpush1.bf16.msra.mxu0 0
        %1104 = vmatprep.mubr.bf16.mxu0 0
        %1105 = vmatmul.mubr.bf16.gmra.mrb[0].mxu0 %v1070
        %v1106 = vpop.f32.mrb[0].mxu0
        %v1107 = vadd.f32 0.0, %v1106
        %v1108 = vpop.f32.mrb[0].mxu0
        %v1109 = vpop.f32.mrb[0].mxu0
        %v1110 = vpop.f32.mrb[0].mxu0
        %1111 = vdwg.mxu0
        %v1112 = vadd.f32 %v1058, %v1107
        %v1113 = vld [vmem:[%s763] sm:$0xf]
        %s1114 = scalar_lea.vmem %s9, 48
        %v1115 = vld [vmem:[%s1114] sm:$0xf]
        %v1116 = vld [vmem:[%s1114 + $0x4] sm:$0xf]
        %v1119 = vunpack.c.l.b16 %v1115
        %v1120 = vunpack.c.l.b16 %v1116
        %v1121 = vpack.c.b16 %v1120, %v1119
        %v1124 = vsel %vm804, %v1113, 0
        %1126 = vmatprep.subr.bf16.mxu0 0
        %1127 = vmatpush1.bf16.msra.mxu0 %v1121
        %1128 = vmatprep.subr.bf16.mxu0 0
        %1129 = vmatpush1.bf16.msra.mxu0 0
        %1130 = vmatprep.subr.bf16.mxu0 0
        %1131 = vmatpush1.bf16.msra.mxu0 0
        %1132 = vmatprep.subr.bf16.mxu0 0
        %1133 = vmatpush1.bf16.msra.mxu0 0
        %1134 = vmatprep.subr.bf16.mxu0 0
        %1135 = vmatpush1.bf16.msra.mxu0 0
        %1136 = vmatprep.subr.bf16.mxu0 0
        %1137 = vmatpush1.bf16.msra.mxu0 0
        %1138 = vmatprep.subr.bf16.mxu0 0
        %1139 = vmatpush1.bf16.msra.mxu0 0
        %1140 = vmatprep.subr.bf16.mxu0 0
        %1141 = vmatpush1.bf16.msra.mxu0 0
        %1142 = vmatprep.subr.bf16.mxu0 0
        %1143 = vmatpush1.bf16.msra.mxu0 0
        %1144 = vmatprep.subr.bf16.mxu0 0
        %1145 = vmatpush1.bf16.msra.mxu0 0
        %1146 = vmatprep.subr.bf16.mxu0 0
        %1147 = vmatpush1.bf16.msra.mxu0 0
        %1148 = vmatprep.subr.bf16.mxu0 0
        %1149 = vmatpush1.bf16.msra.mxu0 0
        %1150 = vmatprep.subr.bf16.mxu0 0
        %1151 = vmatpush1.bf16.msra.mxu0 0
        %1152 = vmatprep.subr.bf16.mxu0 0
        %1153 = vmatpush1.bf16.msra.mxu0 0
        %1154 = vmatprep.subr.bf16.mxu0 0
        %1155 = vmatpush1.bf16.msra.mxu0 0
        %1156 = vmatprep.subr.bf16.mxu0 0
        %1157 = vmatpush1.bf16.msra.mxu0 0
        %1158 = vmatprep.mubr.bf16.mxu0 0
        %1159 = vmatmul.mubr.bf16.gmra.mrb[0].mxu0 %v1124
        %v1160 = vpop.f32.mrb[0].mxu0
        %v1161 = vadd.f32 0.0, %v1160
        %v1162 = vpop.f32.mrb[0].mxu0
        %v1163 = vpop.f32.mrb[0].mxu0
        %v1164 = vpop.f32.mrb[0].mxu0
        %1165 = vdwg.mxu0
        %v1166 = vadd.f32 %v1112, %v1161
        %v1167 = vld [vmem:[%s775] sm:$0xf]
        %s1168 = scalar_lea.vmem %s9, 56
        %v1169 = vld [vmem:[%s1168] sm:$0xf]
        %v1170 = vld [vmem:[%s1168 + $0x4] sm:$0xf]
        %v1173 = vunpack.c.l.b16 %v1169
        %v1174 = vunpack.c.l.b16 %v1170
        %v1175 = vpack.c.b16 %v1174, %v1173
        %v1178 = vsel %vm804, %v1167, 0
        %1180 = vmatprep.subr.bf16.mxu0 0
        %1181 = vmatpush1.bf16.msra.mxu0 %v1175
        %1182 = vmatprep.subr.bf16.mxu0 0
        %1183 = vmatpush1.bf16.msra.mxu0 0
        %1184 = vmatprep.subr.bf16.mxu0 0
        %1185 = vmatpush1.bf16.msra.mxu0 0
        %1186 = vmatprep.subr.bf16.mxu0 0
        %1187 = vmatpush1.bf16.msra.mxu0 0
        %1188 = vmatprep.subr.bf16.mxu0 0
        %1189 = vmatpush1.bf16.msra.mxu0 0
        %1190 = vmatprep.subr.bf16.mxu0 0
        %1191 = vmatpush1.bf16.msra.mxu0 0
        %1192 = vmatprep.subr.bf16.mxu0 0
        %1193 = vmatpush1.bf16.msra.mxu0 0
        %1194 = vmatprep.subr.bf16.mxu0 0
        %1195 = vmatpush1.bf16.msra.mxu0 0
        %1196 = vmatprep.subr.bf16.mxu0 0
        %1197 = vmatpush1.bf16.msra.mxu0 0
        %1198 = vmatprep.subr.bf16.mxu0 0
        %1199 = vmatpush1.bf16.msra.mxu0 0
        %1200 = vmatprep.subr.bf16.mxu0 0
        %1201 = vmatpush1.bf16.msra.mxu0 0
        %1202 = vmatprep.subr.bf16.mxu0 0
        %1203 = vmatpush1.bf16.msra.mxu0 0
        %1204 = vmatprep.subr.bf16.mxu0 0
        %1205 = vmatpush1.bf16.msra.mxu0 0
        %1206 = vmatprep.subr.bf16.mxu0 0
        %1207 = vmatpush1.bf16.msra.mxu0 0
        %1208 = vmatprep.subr.bf16.mxu0 0
        %1209 = vmatpush1.bf16.msra.mxu0 0
        %1210 = vmatprep.subr.bf16.mxu0 0
        %1211 = vmatpush1.bf16.msra.mxu0 0
        %1212 = vmatprep.mubr.bf16.mxu0 0
        %1213 = vmatmul.mubr.bf16.gmra.mrb[0].mxu0 %v1178
        %v1214 = vpop.f32.mrb[0].mxu0
        %v1215 = vadd.f32 0.0, %v1214
        %v1216 = vpop.f32.mrb[0].mxu0
        %v1217 = vpop.f32.mrb[0].mxu0
        %v1218 = vpop.f32.mrb[0].mxu0
        %1219 = vdwg.mxu0
        %v1220 = vadd.f32 %v1166, %v1215
        %v1221 = vld [vmem:[%s787] sm:$0xf]
        %s1222 = scalar_lea.vmem %s9, 64
        %v1223 = vld [vmem:[%s1222] sm:$0xf]
        %v1224 = vld [vmem:[%s1222 + $0x4] sm:$0xf]
        %v1227 = vunpack.c.l.b16 %v1223
        %v1228 = vunpack.c.l.b16 %v1224
        %v1229 = vpack.c.b16 %v1228, %v1227
        %v1232 = vsel %vm804, %v1221, 0
        %1234 = vmatprep.subr.bf16.mxu0 0
        %1235 = vmatpush1.bf16.msra.mxu0 %v1229
        %1236 = vmatprep.subr.bf16.mxu0 0
        %1237 = vmatpush1.bf16.msra.mxu0 0
        %1238 = vmatprep.subr.bf16.mxu0 0
        %1239 = vmatpush1.bf16.msra.mxu0 0
        %1240 = vmatprep.subr.bf16.mxu0 0
        %1241 = vmatpush1.bf16.msra.mxu0 0
        %1242 = vmatprep.subr.bf16.mxu0 0
        %1243 = vmatpush1.bf16.msra.mxu0 0
        %1244 = vmatprep.subr.bf16.mxu0 0
        %1245 = vmatpush1.bf16.msra.mxu0 0
        %1246 = vmatprep.subr.bf16.mxu0 0
        %1247 = vmatpush1.bf16.msra.mxu0 0
        %1248 = vmatprep.subr.bf16.mxu0 0
        %1249 = vmatpush1.bf16.msra.mxu0 0
        %1250 = vmatprep.subr.bf16.mxu0 0
        %1251 = vmatpush1.bf16.msra.mxu0 0
        %1252 = vmatprep.subr.bf16.mxu0 0
        %1253 = vmatpush1.bf16.msra.mxu0 0
        %1254 = vmatprep.subr.bf16.mxu0 0
        %1255 = vmatpush1.bf16.msra.mxu0 0
        %1256 = vmatprep.subr.bf16.mxu0 0
        %1257 = vmatpush1.bf16.msra.mxu0 0
        %1258 = vmatprep.subr.bf16.mxu0 0
        %1259 = vmatpush1.bf16.msra.mxu0 0
        %1260 = vmatprep.subr.bf16.mxu0 0
        %1261 = vmatpush1.bf16.msra.mxu0 0
        %1262 = vmatprep.subr.bf16.mxu0 0
        %1263 = vmatpush1.bf16.msra.mxu0 0
        %1264 = vmatprep.subr.bf16.mxu0 0
        %1265 = vmatpush1.bf16.msra.mxu0 0
        %1266 = vmatprep.mubr.bf16.mxu0 0
        %1267 = vmatmul.mubr.bf16.gmra.mrb[0].mxu0 %v1232
        %v1268 = vpop.f32.mrb[0].mxu0
        %v1269 = vadd.f32 0.0, %v1268
        %v1270 = vpop.f32.mrb[0].mxu0
        %v1271 = vpop.f32.mrb[0].mxu0
        %v1272 = vpop.f32.mrb[0].mxu0
        %1273 = vdwg.mxu0
        %v1274 = vadd.f32 %v1220, %v1269
        %v1275 = vld [vmem:[%s10] sm:$0x1]
        %v1277 = vlaneseq
        %v1278 = vshrl.u32 %v1277, 7
        %v1279 = vsub.s32 0, %v1278
        %v1280 = vrot.slane %v1275, %v1279
        %v1282 = vmul.f32 %v1274, %v1280
        %v1283 = vld [vmem:[%s11] sm:$0x1]
        %v1285 = vlaneseq
        %v1286 = vshrl.u32 %v1285, 7
        %v1287 = vsub.s32 0, %v1286
        %v1288 = vrot.slane %v1283, %v1287
        %v1290 = vadd.f32 %v1282, %v1288
        %v1291 = vmax.f32 %v1290, 0.0
        %v1292 = vpack.c.bf16 %v1291, %v1291
        %vm1293 = vcmask 257024
        %1294 = vst.msk [vmem:[%s687] sm:$0xf] %vm1293, %v1292
        %s1295 = sand.u32 %s393, 1
        %s1296 = scalar_lea.sflag [#allocation3], %s1295
        %s1297 = sand.u32 %s393, 1
        %s1298 = smul.addr %s1297, 4
        %s1299 = scalar_lea.vmem [#allocation2], %s1298
        // Predicated region
        $region69: #{tpu_custom_call.1} parent=67 // pred_check
          %p1300 = pneg %p403
        $region70: #{tpu_custom_call.1} parent=67 // pred_check_branch
          %1302 = sbr.rel (%p1300) target = $region72
        $region71: #{tpu_custom_call.1} parent=67 // pred_region
          %s1304 = ssub.s32 64, 64
          %1305 = vsyncadd %s1296, %s1304
          %s1306 = smul.addr %s30, 8
          %s1307 = sadd.s32 %s31, %s1306
          %s1308 = smul.addr %s1307, 64
          %s1309 = scalar_lea.hbm %s12, %s1308
          %s1311 = sshll.u32 %s1299, 4
          %s1312 = int_to_ptr.vmem [resolvable:$true] %s1311
          %1314 = dma.vmem_to_hbm [thread:$0]  %s1312, 64, %s1309, %s1296
        $region72: #{tpu_custom_call.1} parent=67 // pred_fallthru
          _
      $region68: #{tpu_custom_call.1} parent=5 // pred_fallthru
        _
      %p1315 = scmp.le.s32.totalorder 2, %s21
      // Predicated region
      $region73: #{tpu_custom_call.1} parent=5 // pred_check
        %p1316 = pneg %p1315
      $region74: #{tpu_custom_call.1} parent=5 // pred_check_branch
        %1318 = sbr.rel (%p1316) target = $region76
      $region75: #{tpu_custom_call.1} parent=5 // pred_region
        %s1319 = ssub.s32 %s21, 2
        // Predicated region
        $region77: #{tpu_custom_call.1} parent=75 // pred_check
          %p1320 = pneg %p409
        $region78: #{tpu_custom_call.1} parent=75 // pred_check_branch
          %1322 = sbr.rel (%p1320) target = $region80
        $region79: #{tpu_custom_call.1} parent=75 // pred_region
          %s1323 = sand.u32 %s394, 1
          %s1324 = scalar_lea.sflag [#allocation3], %s1323
          %s1325 = sand.u32 %s394, 1
          %s1326 = smul.addr %s1325, 4
          %s1327 = scalar_lea.vmem [#allocation2], %s1326
          %1328 = dma.done %s1324, 64
        $region80: #{tpu_custom_call.1} parent=75 // pred_fallthru
          _
      $region76: #{tpu_custom_call.1} parent=5 // pred_fallthru
        _
    $region6: #{tpu_custom_call.1} parent=1 // loop_footer
      %s25 = sadd.s32 1, %s21
    $region7: #{tpu_custom_call.1} parent=1 // loop_footer_branch
      %20 = sbr.rel target = $region3
    $region8: #{tpu_custom_call.1} parent=1 // loop_exit
      _
    %1329 = vsyncpa [#allocation3], 1
    %s1330 = scalar_lea.sflag [#allocation3], 1
    %1331 = vsyncpa %s1330, 1

</llo_original>
